<compile_context>
chip_gen: v5e
topology: v5e:2x2
jax: 0.10.0
libtpu: 0.0.40
codegen_flags: <defaults>
</compile_context>

<pallas_src>
import functools

import jax
import jax.numpy as jnp
from jax import lax
from jax.experimental import pallas as pl
from jax.experimental.pallas import tpu as pltpu


def _round_up(v, m):
    return (v + m - 1) // m * m


def _cdiv(a, b):
    return (a + b - 1) // b


def _vmem_capacity_bytes():
    try:
        return int(pltpu.get_tpu_info().vmem_capacity_bytes)
    except Exception:
        return 64 << 20   # conservative (v7x-sized) fallback


def _maybe_single_buffered(block_shape, index_map):
    """BlockSpec that is single-buffered (resident) when the API allows it."""
    try:
        return pl.BlockSpec(block_shape, index_map,
                            pipeline_mode=pl.Buffered(1))
    except Exception:
        return pl.BlockSpec(block_shape, index_map)


# -------- shared implicit-GEMM conv tile: ONE big-K MXU matmul --------

def _conv_tile(x_ref, w_ref, row0, *, KH, KW, dil, TH, OW_p, Cin_p):
    # x_ref : (1, Hp_ext, Wp_ext, Cin_p) bf16, whole padded image (resident)
    # w_ref : (KH*KW*Cin_p, Cp)          bf16, (ki, kj, c) ordering on K
    taps = []
    for ki in range(KH):
        for kj in range(KW):
            taps.append(x_ref[0, pl.ds(row0 + ki * dil, TH),
                              pl.ds(kj * dil, OW_p), :])
    lhs = jnp.concatenate(taps, axis=-1)             # (TH, OW_p, KH*KW*Cin_p)
    lhs = lhs.reshape(TH * OW_p, KH * KW * Cin_p)
    return jnp.dot(lhs, w_ref[...], preferred_element_type=jnp.float32)


# -------- pass 1: BN batch statistics only (no conv writeback) --------

def _conv_stats_kernel(x_ref, w_ref, sum_ref, sq_ref, *, KH, KW, dil, TH, OW,
                       OW_p, OH, OH_pad, Cin_p):
    t = pl.program_id(1)
    row0 = t * TH
    if TH % 8 == 0:
        row0 = pl.multiple_of(row0, 8)

    y = _conv_tile(x_ref, w_ref, row0, KH=KH, KW=KW, dil=dil, TH=TH,
                   OW_p=OW_p, Cin_p=Cin_p)           # (TH*OW_p, Cp) f32

    # Only rows/cols introduced by OH/OW tile rounding can hold garbage (they
    # read real pixels); conv zero-padding rows/cols are exact zeros (no bias),
    # so they need no mask.  Specialized statically.
    mask_rows = OH_pad != OH
    mask_cols = OW_p != OW
    if mask_rows or mask_cols:
        y3 = y.reshape(TH, OW_p, y.shape[-1])
        if mask_rows:
            ohs = row0 + lax.broadcasted_iota(jnp.int32, y3.shape, 0)
            y3 = jnp.where(ohs < OH, y3, 0.0)
        if mask_cols:
            ows = lax.broadcasted_iota(jnp.int32, y3.shape, 1)
            y3 = jnp.where(ows < OW, y3, 0.0)
        y = y3.reshape(TH * OW_p, y3.shape[-1])

    sum_ref[...] = jnp.sum(y, axis=0).reshape(sum_ref.shape)
    sq_ref[...] = jnp.sum(y * y, axis=0).reshape(sq_ref.shape)


# -------- pass 2: recompute conv, fused scale/shift BN + ReLU, final store ---

def _conv_bn_relu_kernel(x_ref, w_ref, scale_ref, shift_ref, o_ref, *, KH, KW,
                         dil, TH, OW, OW_p, Cin_p, C_out):
    t = pl.program_id(1)
    row0 = t * TH
    if TH % 8 == 0:
        row0 = pl.multiple_of(row0, 8)

    y = _conv_tile(x_ref, w_ref, row0, KH=KH, KW=KW, dil=dil, TH=TH,
                   OW_p=OW_p, Cin_p=Cin_p)           # (TH*OW_p, Cp) f32
    z = jnp.maximum(y * scale_ref[...] + shift_ref[...], 0.0)
    z3 = z.reshape(TH, OW_p, z.shape[-1])
    # Crop the width / lane padding in-kernel; only real (OW, C_out) hits HBM.
    o_ref[...] = z3[:, :OW, :C_out].reshape(o_ref.shape)


# ---------------- wrapper ----------------

def conv2_bn_relu(x, weight, bias, gamma, beta, *, stride=1, pad=0, dil=1,
                  eps=1e-5, mxu_dtype=jnp.bfloat16):
    """x: (N, C_in, H, W) f32. weight: (C_out, C_in, KH, KW). Returns NCHW."""
    # Conv bias cancels exactly under training-mode BatchNorm (batch-mean
    # subtraction removes any per-channel constant), so it is unused.  This is
    # only valid because BN here always uses batch statistics.
    del bias
    # TODO(synk): stride > 1 would need strided in-kernel window slicing; the
    # module default (and the only exercised path) is stride=1.
    assert stride == 1, "only stride=1 (module default) is implemented"

    N, C, H, W = x.shape
    C_out, C_in, KH, KW = weight.shape
    assert C_in == C

    OH = (H + 2 * pad - (dil * (KH - 1) + 1)) // stride + 1
    OW = (W + 2 * pad - (dil * (KW - 1) + 1)) // stride + 1
    assert OH > 0 and OW > 0

    lane = 128
    OW_p = _round_up(OW, 8)            # sublane-aligned tile width
    Cp = _round_up(C_out, lane)        # lane-dense MXU output channels
    Cin_p = _round_up(C, 8)            # contraction dim padded toward 8
    K_tot = KH * KW * Cin_p

    # ---- generation-aware tile sizing ----
    cap_bytes = _vmem_capacity_bytes()
    big_vmem = cap_bytes >= (96 << 20)         # v5e/v6e (128 MiB) vs v7x (64)
    tile_budget = (8 << 20) if big_vmem else (3 << 20)
    row_target = 2048 if big_vmem else 512     # target M = TH*OW_p rows/matmul
    bytes_per_row = OW_p * lane * 4            # f32 dot result per output row
    th_cap = max(1, tile_budget // bytes_per_row)
    th_target = max(1, min(OH, max(1, row_target // OW_p), th_cap))
    TH = th_target
    for d in range(th_target, max(1, th_target // 2) - 1, -1):
        if OH % d == 0:
            TH = d
            break
    else:
        if th_target >= 8:
            TH = (th_target // 8) * 8  # 8-aligned H slices; last tile is masked
    n_t = _cdiv(OH, TH)
    OH_pad = n_t * TH

    # ---- NHWC + zero pad (conv pad + tile rounding + C_in pad), bf16 ----
    # Single fused XLA prep pass.  TODO(synk): accept NHWC input upstream to
    # drop this layout transpose entirely.
    x_nhwc = jnp.transpose(x, (0, 2, 3, 1)).astype(mxu_dtype)
    pad_b = pad + (OH_pad - OH)
    pad_r = pad + (OW_p - OW)
    x_p = jnp.pad(x_nhwc, ((0, 0), (pad, pad_b), (pad, pad_r), (0, Cin_p - C)))
    Hp_ext = H + pad + pad_b
    Wp_ext = W + pad + pad_r

    # ---- weights: (KH*KW*Cin_p, Cp) with (ki, kj, c) ordering on K ----
    wmat = jnp.transpose(weight, (2, 3, 1, 0))            # (KH, KW, Cin, Cout)
    wmat = jnp.pad(wmat, ((0, 0), (0, 0), (0, Cin_p - C), (0, Cp - C_out)))
    wmat = wmat.reshape(K_tot, Cp).astype(mxu_dtype)

    # ---- advisory VMEM limit (generation-aware cap) ----
    xb = Hp_ext * _round_up(Wp_ext, 8) * lane * 2     # resident bf16 image, 1 buf
    wb = _round_up(K_tot, 8) * Cp * 2
    ob = 2 * TH * _round_up(OW, 8) * lane * 4         # double-buffered output
    work = TH * OW_p * (_round_up(K_tot, lane) * 2 + Cp * 4) * 2
    est = xb + wb + ob + work + (256 << 10)
    if est < (16 << 20):
        vmem_limit = None
    else:
        vmem_limit = int(min(max(2 * est, 32 << 20), int(0.72 * cap_bytes)))
    cparams = pltpu.CompilerParams(
        dimension_semantics=("parallel", "parallel"),
        vmem_limit_bytes=vmem_limit)

    # TODO(synk): for images whose padded NHWC slab exceeds VMEM, an H-halo
    # tiled x block (or manual make_async_copy) is still needed; here the whole
    # padded image is resident (single-buffered) per grid step.
    x_spec = _maybe_single_buffered((1, Hp_ext, Wp_ext, Cin_p),
                                    lambda n, t: (n, 0, 0, 0))
    w_spec = _maybe_single_buffered((K_tot, Cp), lambda n, t: (0, 0))

    # ---- pass 1: BN batch statistics only ----
    kern_stats = functools.partial(
        _conv_stats_kernel, KH=KH, KW=KW, dil=dil, TH=TH, OW=OW, OW_p=OW_p,
        OH=OH, OH_pad=OH_pad, Cin_p=Cin_p)
    sum_part, sq_part = pl.pallas_call(
        kern_stats,
        out_shape=(jax.ShapeDtypeStruct((N * n_t, 1, Cp), jnp.float32),
                   jax.ShapeDtypeStruct((N * n_t, 1, Cp), jnp.float32)),
        grid_spec=pltpu.PrefetchScalarGridSpec(
            num_scalar_prefetch=0,
            grid=(N, n_t),
            in_specs=[x_spec, w_spec],
            out_specs=[
                pl.BlockSpec((1, 1, Cp), lambda n, t: (n * n_t + t, 0, 0)),
                pl.BlockSpec((1, 1, Cp), lambda n, t: (n * n_t + t, 0, 0)),
            ]),
        compiler_params=cparams,
    )(x_p, wmat)

    # ---- fold BN (training-mode batch stats, biased var) into scale/shift ----
    m_valid = float(N * OH * OW)
    sums = jnp.sum(sum_part[:, 0, :], axis=0)
    sqs = jnp.sum(sq_part[:, 0, :], axis=0)
    mean = sums / m_valid
    # Single-pass variance in f32: conv outputs are near-centered here, so the
    # cancellation error is negligible at these scales.
    var = jnp.maximum(sqs / m_valid - mean * mean, 0.0)
    rstd = lax.rsqrt(var + eps)
    gamma_p = jnp.pad(gamma.astype(jnp.float32), (0, Cp - C_out))
    beta_p = jnp.pad(beta.astype(jnp.float32), (0, Cp - C_out))
    scale = (gamma_p * rstd).reshape(1, Cp)
    shift = (beta_p - mean * gamma_p * rstd).reshape(1, Cp)

    # ---- pass 2: recompute conv + fused BN/ReLU, single final store ----
    kern_final = functools.partial(
        _conv_bn_relu_kernel, KH=KH, KW=KW, dil=dil, TH=TH, OW=OW, OW_p=OW_p,
        Cin_p=Cin_p, C_out=C_out)
    y_nhwc = pl.pallas_call(
        kern_final,
        out_shape=jax.ShapeDtypeStruct((N, OH_pad, OW, C_out), jnp.float32),
        grid_spec=pltpu.PrefetchScalarGridSpec(
            num_scalar_prefetch=0,
            grid=(N, n_t),
            in_specs=[x_spec, w_spec,
                      _maybe_single_buffered((1, Cp), lambda n, t: (0, 0)),
                      _maybe_single_buffered((1, Cp), lambda n, t: (0, 0))],
            out_specs=pl.BlockSpec((1, TH, OW, C_out),
                                   lambda n, t: (n, t, 0, 0))),
        compiler_params=cparams,
    )(x_p, wmat, scale, shift)

    # Only the final NHWC->NCHW layout swap (plus an H-crop when OH was tile
    # rounded) is left to XLA: one fused pass over the already-cropped output.
    if OH_pad != OH:
        y_nhwc = y_nhwc[:, :OH]
    return jnp.transpose(y_nhwc, (0, 3, 1, 2))


# ---------------- reference (pure JAX) for sanity check ----------------

def _reference(x, weight, bias, gamma, beta, *, stride=1, pad=0, dil=1,
               eps=1e-5):
    y = lax.conv_general_dilated(
        x, weight, window_strides=(stride, stride),
        padding=[(pad, pad), (pad, pad)], rhs_dilation=(dil, dil),
        dimension_numbers=("NCHW", "OIHW", "NCHW"))
    y = y + bias[None, :, None, None]
    mean = y.mean(axis=(0, 2, 3), keepdims=True)
    var = ((y - mean) ** 2).mean(axis=(0, 2, 3), keepdims=True)
    yhat = (y - mean) * lax.rsqrt(var + eps)
    yhat = yhat * gamma[None, :, None, None] + beta[None, :, None, None]
    return jnp.maximum(yhat, 0.0)


def _check(out, x, weight, bias, gamma, beta, *, pad, dil, tag):
    # Tight apples-to-apples check: the kernel feeds the MXU bf16 inputs with
    # f32 accumulation, so compare against f32 reference math evaluated on
    # bf16-rounded conv inputs.
    x_r = x.astype(jnp.bfloat16).astype(jnp.float32)
    w_r = weight.astype(jnp.bfloat16).astype(jnp.float32)
    ref = _reference(x_r, w_r, bias, gamma, beta, stride=1, pad=pad, dil=dil)
    if not jnp.allclose(out, ref, atol=2e-3, rtol=2e-3):
        raise AssertionError(f"mismatch vs bf16-input reference ({tag})")
    # Loose sanity check against the exact f32 module math (guards gross
    # errors; slack covers bf16 input-rounding of the MXU operands).
    ref32 = _reference(x, weight, bias, gamma, beta, stride=1, pad=pad, dil=dil)
    if not jnp.allclose(out, ref32, atol=1e-1, rtol=1e-1):
        raise AssertionError(f"mismatch vs f32 reference ({tag})")


if __name__ == "__main__":
    key = jax.random.PRNGKey(0)
    k1, k2, k3, k4, k5 = jax.random.split(key, 5)

    # Conv2BnRelu(in_size=4, out_size=8, filter_size=3, stride=1, pad=0)
    N, Cin, Hs, Ws = 2, 4, 16, 16
    Cout, ksz = 8, 3

    x = jax.random.normal(k1, (N, Cin, Hs, Ws), jnp.float32)
    fan_in = Cin * ksz * ksz
    bound = 1.0 / (fan_in ** 0.5)
    weight = jax.random.uniform(k2, (Cout, Cin, ksz, ksz), jnp.float32,
                                -bound, bound)
    bias = jax.random.uniform(k3, (Cout,), jnp.float32, -bound, bound)
    gamma = jax.random.uniform(k4, (Cout,), jnp.float32, 0.5, 1.5)
    beta = 0.1 * jax.random.normal(k5, (Cout,), jnp.float32)

    # default forward: module defaults stride=1, pad=0, forward dil=1
    out = conv2_bn_relu(x, weight, bias, gamma, beta, stride=1, pad=0, dil=1)
    out = jax.block_until_ready(out)
    assert out.shape == (N, Cout, Hs - 2, Ws - 2), out.shape
    _check(out, x, weight, bias, gamma, beta, pad=0, dil=1, tag="pad=0,dil=1")

    # second config exercising conv padding + the forward()'s dilation arg
    out2 = conv2_bn_relu(x, weight, bias, gamma, beta, stride=1, pad=1, dil=2)
    out2 = jax.block_until_ready(out2)
    assert out2.shape == (N, Cout, 14, 14), out2.shape
    _check(out2, x, weight, bias, gamma, beta, pad=1, dil=2, tag="pad=1,dil=2")

    print("KERNEL_OK")
</pallas_src>

<mosaic_0001>
module attributes {stable_mosaic.version = 11 : i64} {
  func.func @_conv_stats_kernel(%arg0: i32, %arg1: i32, %arg2: memref<1x16x18x8xbf16, #tpu.memory_space<vmem>>, %arg3: memref<72x128xbf16, #tpu.memory_space<vmem>>, %arg4: memref<1x1x128xf32, #tpu.memory_space<vmem>>, %arg5: memref<1x1x128xf32, #tpu.memory_space<vmem>>) attributes {dimension_semantics = [#tpu.dimension_semantics<parallel>, #tpu.dimension_semantics<parallel>], iteration_bounds = array<i64: 2, 1>, scalar_prefetch = 0 : i64, scratch_operands = 0 : i64, tpu.core_type = #tpu.core_type<tc>, window_params = [{pipeline_mode = #tpu.pipeline_mode<synchronous>, transform_indices = @transform_0, window_bounds = array<i64: 1, 16, 18, 8>}, {pipeline_mode = #tpu.pipeline_mode<synchronous>, transform_indices = @transform_1, window_bounds = array<i64: 72, 128>}, {transform_indices = @transform_2, window_bounds = array<i64: 1, 1, 128>}, {transform_indices = @transform_3, window_bounds = array<i64: 1, 1, 128>}]} {
    %c14_i32 = arith.constant 14 : i32
    %0 = arith.muli %arg1, %c14_i32 : i32
    %c0_i32 = arith.constant 0 : i32
    %1 = arith.addi %0, %c0_i32 : i32
    %c0 = arith.constant 0 : index
    %2 = arith.index_cast %1 : i32 to index
    %c0_0 = arith.constant 0 : index
    %c0_1 = arith.constant 0 : index
    %3 = vector.load %arg2[%c0, %2, %c0_0, %c0_1] : memref<1x16x18x8xbf16, #tpu.memory_space<vmem>>, vector<1x14x16x8xbf16>
    %4 = vector.shape_cast %3 : vector<1x14x16x8xbf16> to vector<14x16x8xbf16>
    %c0_i32_2 = arith.constant 0 : i32
    %5 = arith.addi %0, %c0_i32_2 : i32
    %c0_3 = arith.constant 0 : index
    %6 = arith.index_cast %5 : i32 to index
    %c1 = arith.constant 1 : index
    %c0_4 = arith.constant 0 : index
    %7 = vector.load %arg2[%c0_3, %6, %c1, %c0_4] : memref<1x16x18x8xbf16, #tpu.memory_space<vmem>>, vector<1x14x16x8xbf16>
    %8 = vector.shape_cast %7 : vector<1x14x16x8xbf16> to vector<14x16x8xbf16>
    %c0_i32_5 = arith.constant 0 : i32
    %9 = arith.addi %0, %c0_i32_5 : i32
    %c0_6 = arith.constant 0 : index
    %10 = arith.index_cast %9 : i32 to index
    %c2 = arith.constant 2 : index
    %c0_7 = arith.constant 0 : index
    %11 = vector.load %arg2[%c0_6, %10, %c2, %c0_7] : memref<1x16x18x8xbf16, #tpu.memory_space<vmem>>, vector<1x14x16x8xbf16>
    %12 = vector.shape_cast %11 : vector<1x14x16x8xbf16> to vector<14x16x8xbf16>
    %c1_i32 = arith.constant 1 : i32
    %13 = arith.addi %0, %c1_i32 : i32
    %c0_8 = arith.constant 0 : index
    %14 = arith.index_cast %13 : i32 to index
    %c0_9 = arith.constant 0 : index
    %c0_10 = arith.constant 0 : index
    %15 = vector.load %arg2[%c0_8, %14, %c0_9, %c0_10] : memref<1x16x18x8xbf16, #tpu.memory_space<vmem>>, vector<1x14x16x8xbf16>
    %16 = vector.shape_cast %15 : vector<1x14x16x8xbf16> to vector<14x16x8xbf16>
    %c1_i32_11 = arith.constant 1 : i32
    %17 = arith.addi %0, %c1_i32_11 : i32
    %c0_12 = arith.constant 0 : index
    %18 = arith.index_cast %17 : i32 to index
    %c1_13 = arith.constant 1 : index
    %c0_14 = arith.constant 0 : index
    %19 = vector.load %arg2[%c0_12, %18, %c1_13, %c0_14] : memref<1x16x18x8xbf16, #tpu.memory_space<vmem>>, vector<1x14x16x8xbf16>
    %20 = vector.shape_cast %19 : vector<1x14x16x8xbf16> to vector<14x16x8xbf16>
    %c1_i32_15 = arith.constant 1 : i32
    %21 = arith.addi %0, %c1_i32_15 : i32
    %c0_16 = arith.constant 0 : index
    %22 = arith.index_cast %21 : i32 to index
    %c2_17 = arith.constant 2 : index
    %c0_18 = arith.constant 0 : index
    %23 = vector.load %arg2[%c0_16, %22, %c2_17, %c0_18] : memref<1x16x18x8xbf16, #tpu.memory_space<vmem>>, vector<1x14x16x8xbf16>
    %24 = vector.shape_cast %23 : vector<1x14x16x8xbf16> to vector<14x16x8xbf16>
    %c2_i32 = arith.constant 2 : i32
    %25 = arith.addi %0, %c2_i32 : i32
    %c0_19 = arith.constant 0 : index
    %26 = arith.index_cast %25 : i32 to index
    %c0_20 = arith.constant 0 : index
    %c0_21 = arith.constant 0 : index
    %27 = vector.load %arg2[%c0_19, %26, %c0_20, %c0_21] : memref<1x16x18x8xbf16, #tpu.memory_space<vmem>>, vector<1x14x16x8xbf16>
    %28 = vector.shape_cast %27 : vector<1x14x16x8xbf16> to vector<14x16x8xbf16>
    %c2_i32_22 = arith.constant 2 : i32
    %29 = arith.addi %0, %c2_i32_22 : i32
    %c0_23 = arith.constant 0 : index
    %30 = arith.index_cast %29 : i32 to index
    %c1_24 = arith.constant 1 : index
    %c0_25 = arith.constant 0 : index
    %31 = vector.load %arg2[%c0_23, %30, %c1_24, %c0_25] : memref<1x16x18x8xbf16, #tpu.memory_space<vmem>>, vector<1x14x16x8xbf16>
    %32 = vector.shape_cast %31 : vector<1x14x16x8xbf16> to vector<14x16x8xbf16>
    %c2_i32_26 = arith.constant 2 : i32
    %33 = arith.addi %0, %c2_i32_26 : i32
    %c0_27 = arith.constant 0 : index
    %34 = arith.index_cast %33 : i32 to index
    %c2_28 = arith.constant 2 : index
    %c0_29 = arith.constant 0 : index
    %35 = vector.load %arg2[%c0_27, %34, %c2_28, %c0_29] : memref<1x16x18x8xbf16, #tpu.memory_space<vmem>>, vector<1x14x16x8xbf16>
    %36 = vector.shape_cast %35 : vector<1x14x16x8xbf16> to vector<14x16x8xbf16>
    %37 = tpu.concatenate %4, %8, %12, %16, %20, %24, %28, %32, %36 in 2 : vector<14x16x8xbf16>, vector<14x16x8xbf16>, vector<14x16x8xbf16>, vector<14x16x8xbf16>, vector<14x16x8xbf16>, vector<14x16x8xbf16>, vector<14x16x8xbf16>, vector<14x16x8xbf16>, vector<14x16x8xbf16> -> vector<14x16x72xbf16>
    %38 = vector.shape_cast %37 : vector<14x16x72xbf16> to vector<224x72xbf16>
    %c0_30 = arith.constant 0 : index
    %c0_31 = arith.constant 0 : index
    %39 = vector.load %arg3[%c0_30, %c0_31] : memref<72x128xbf16, #tpu.memory_space<vmem>>, vector<72x128xbf16>
    %cst = arith.constant dense<0.000000e+00> : vector<224x128xf32>
    %40 = tpu.matmul %38, %39, %cst {dimension_numbers = #tpu.dot_dimension_numbers<[1], [0], [0], [1], [0, 0, 1, 1], [], []>} : vector<224x72xbf16>, vector<72x128xbf16>, vector<224x128xf32> -> vector<224x128xf32>
    %41 = vector.shape_cast %40 : vector<224x128xf32> to vector<14x16x128xf32>
    %42 = tpu.iota {dimensions = array<i32: 1>} : vector<14x16x128xi32>
    %c14_i32_32 = arith.constant 14 : i32
    %43 = vector.broadcast %c14_i32_32 : i32 to vector<14x16x128xi32>
    %44 = arith.cmpi slt, %42, %43 : vector<14x16x128xi32>
    %cst_33 = arith.constant 0.000000e+00 : f32
    %45 = vector.broadcast %cst_33 : f32 to vector<14x16x128xf32>
    %46 = arith.select %44, %41, %45 : vector<14x16x128xi1>, vector<14x16x128xf32>
    %47 = vector.shape_cast %46 : vector<14x16x128xf32> to vector<224x128xf32>
    %cst_34 = arith.constant dense<0.000000e+00> : vector<128xf32>
    %48 = vector.multi_reduction <add>, %47, %cst_34 [0] : vector<224x128xf32> to vector<128xf32>
    %49 = vector.shape_cast %48 : vector<128xf32> to vector<1x1x128xf32>
    %c0_35 = arith.constant 0 : index
    %c0_36 = arith.constant 0 : index
    %c0_37 = arith.constant 0 : index
    %50 = vector.load %arg4[%c0_35, %c0_36, %c0_37] : memref<1x1x128xf32, #tpu.memory_space<vmem>>, vector<1x1x128xf32>
    tpu.vector_store %arg4[%c0_35, %c0_36, %c0_37], %49 {strides = array<i32>} : memref<1x1x128xf32, #tpu.memory_space<vmem>>, vector<1x1x128xf32>,
    %51 = arith.mulf %47, %47 : vector<224x128xf32>
    %cst_38 = arith.constant dense<0.000000e+00> : vector<128xf32>
    %52 = vector.multi_reduction <add>, %51, %cst_38 [0] : vector<224x128xf32> to vector<128xf32>
    %53 = vector.shape_cast %52 : vector<128xf32> to vector<1x1x128xf32>
    %c0_39 = arith.constant 0 : index
    %c0_40 = arith.constant 0 : index
    %c0_41 = arith.constant 0 : index
    %54 = vector.load %arg5[%c0_39, %c0_40, %c0_41] : memref<1x1x128xf32, #tpu.memory_space<vmem>>, vector<1x1x128xf32>
    tpu.vector_store %arg5[%c0_39, %c0_40, %c0_41], %53 {strides = array<i32>} : memref<1x1x128xf32, #tpu.memory_space<vmem>>, vector<1x1x128xf32>,
    return
  }
  func.func @transform_0(%arg0: i32, %arg1: i32) -> (i32, i32, i32, i32) {
    %c0_i32 = arith.constant 0 : i32
    %c0_i32_0 = arith.constant 0 : i32
    %c0_i32_1 = arith.constant 0 : i32
    %c0_i32_2 = arith.constant 0 : i32
    return %arg0, %c0_i32, %c0_i32_0, %c0_i32_1 : i32, i32, i32, i32
  }
  func.func @transform_1(%arg0: i32, %arg1: i32) -> (i32, i32) {
    %c0_i32 = arith.constant 0 : i32
    %c0_i32_0 = arith.constant 0 : i32
    %c0_i32_1 = arith.constant 0 : i32
    return %c0_i32, %c0_i32_0 : i32, i32
  }
  func.func @transform_2(%arg0: i32, %arg1: i32) -> (i32, i32, i32) {
    %c1_i32 = arith.constant 1 : i32
    %0 = arith.muli %arg0, %c1_i32 : i32
    %1 = arith.addi %0, %arg1 : i32
    %c0_i32 = arith.constant 0 : i32
    %c0_i32_0 = arith.constant 0 : i32
    %c0_i32_1 = arith.constant 0 : i32
    return %1, %c0_i32, %c0_i32_0 : i32, i32, i32
  }
  func.func @transform_3(%arg0: i32, %arg1: i32) -> (i32, i32, i32) {
    %c1_i32 = arith.constant 1 : i32
    %0 = arith.muli %arg0, %c1_i32 : i32
    %1 = arith.addi %0, %arg1 : i32
    %c0_i32 = arith.constant 0 : i32
    %c0_i32_0 = arith.constant 0 : i32
    %c0_i32_1 = arith.constant 0 : i32
    return %1, %c0_i32, %c0_i32_0 : i32, i32, i32
  }
}

</mosaic_0001>

<llo_original>
// kernel: tpu_custom_call.1
$region0: #{tpu_custom_call.1}
  #allocation0 [shape = 'u32[]', space=smem, size = 0x4, offset = 0x4, fixed_abs, tag = 'smem constant byte address 0x4 - core index']
  #allocation1 [shape = 'u32[72,128]{1,0:T(1,128)}', space=vmem, size = 0x9000, scoped, tag = 'internal scratch']
  %s0 = inlined_call_operand.vmem [shape: bf16[2,16,18,8], index: 0, kind: input, shape index: {}]
  %s1 = inlined_call_operand.vmem [shape: bf16[72,128], index: 1, kind: input, shape index: {}]
  %s2 = inlined_call_operand.hbm [shape: f32[2,1,128], index: 2, kind: output, shape index: {0}]
  %s3 = inlined_call_operand.hbm [shape: f32[2,1,128], index: 3, kind: output, shape index: {1}]
  %4 = xla_tuple %s2, %s3
  %s5 = sld [smem:[#allocation0]]
  $region49: #{tpu_custom_call.1} parent=0
    _
  %s7 = ssub.s32 1, %s5
  %s8 = scalar_select 0, %s7, %s5
  $region1: #{tpu_custom_call.1} parent=0
    #allocation2 [shape = 'u8[1024]{0}', space=vmem, size = 0x400, scoped, tag = 'output window, operand 0']
    #allocation3 [shape = 's32[2]{0}', space=sflag, size = 0x8, scoped, tag = 'scoped memory for tpu_custom_call.1']
    #allocation4 [shape = 'u8[1024]{0}', space=vmem, size = 0x400, scoped, tag = 'output window, operand 1']
    #allocation5 [shape = 's32[2]{0}', space=sflag, size = 0x8, scoped, tag = 'scoped memory for tpu_custom_call.1']
    %9 = vsyncpa [#allocation3], 0
    %s10 = scalar_lea.sflag [#allocation3], 1
    %11 = vsyncpa %s10, 0
    %12 = vsyncpa [#allocation5], 0
    %s13 = scalar_lea.sflag [#allocation5], 1
    %14 = vsyncpa %s13, 0
    loop: start=0, step=1, limit=4
    $region2: #{tpu_custom_call.1} parent=1 // loop_pre_header
      _
    $region3: #{tpu_custom_call.1} parent=1 // loop_header
      %s16 = sphi 0, %s20
      %p17 = scmp.ge.s32.totalorder %s16, 4
      %s23 = sphi 0, %s35
      %s24 = sphi 0, %s31
      %s25 = sphi 0, %s23
      %s26 = sphi 0, %s24
      %s27 = sphi 0, %s25
      %s28 = sphi 0, %s26
      %s38 = sphi 0, %s40
      %s41 = sphi 0, %s38
      %s42 = sphi 0, %s41
      %s58 = sphi 0, %s42
      %s62 = sphi 0, %s62
      %s64 = sphi 0, %s62
      %s65 = sphi 0, %s64
      %s79 = sphi 0, %s65
      %s87 = sphi 0, %s89
      %s90 = sphi 0, %s87
      %s91 = sphi 0, %s90
      %s107 = sphi 0, %s91
      %s115 = sphi 0, %s117
      %s118 = sphi 0, %s115
      %s119 = sphi 0, %s118
      %s135 = sphi 0, %s119
    $region4: #{tpu_custom_call.1} parent=1 // loop_header_branch
      %19 = sbr.rel (%p17) target = $region8
    $region5: #{tpu_custom_call.1} parent=1 // loop_body
      %s21 = ssub.s32 %s16, 1
      %s22 = ssub.s32 %s16, 2
      %s29 = sadd.s32 1, %s24
      %p30 = scmp.ge.s32.totalorder %s29, 1
      %s31 = scalar_select %p30, 0, %s29
      %s32 = sadd.s32 1, %s23
      %s33 = scalar_select %p30, %s32, %s23
      %p34 = scmp.ge.s32.totalorder %s33, 2
      %s35 = scalar_select %p34, 0, %s33
      %s36 = ssub.s32 %s23, %s35
      %p37 = scmp.eq.s32.totalorder %s36, 0
      %s39 = sadd.s32 %s38, 1
      %s40 = scalar_select %p37, %s38, %s39
      %p43 = pneg %p37
      %p44 = scmp.eq.s32.totalorder %s16, 1
      %p45 = por %p43, %p44
      %p46 = scmp.ne.s32.totalorder %s38, %s41
      %p47 = scmp.eq.s32.totalorder %s16, 0
      %p48 = por %p46, %p47
      %p49 = scmp.ne.s32.totalorder %s38, %s41
      %p50 = scmp.eq.s32.totalorder %s21, 1
      %p51 = por %p49, %p50
      %p52 = scmp.ne.s32.totalorder %s41, %s42
      %p53 = scmp.eq.s32.totalorder %s21, 0
      %p54 = por %p52, %p53
      %p55 = scmp.ne.s32.totalorder %s41, %s42
      %p56 = scmp.eq.s32.totalorder %s22, 1
      %p57 = por %p55, %p56
      %p59 = scmp.ne.s32.totalorder %s42, %s58
      %p60 = scmp.eq.s32.totalorder %s22, 0
      %p61 = por %p59, %p60
      %s63 = sadd.s32 %s62, 1
      %p66 = scmp.eq.s32.totalorder %s16, 1
      %p67 = scmp.ne.s32.totalorder %s62, %s64
      %p68 = scmp.eq.s32.totalorder %s16, 0
      %p69 = por %p67, %p68
      %p70 = scmp.ne.s32.totalorder %s62, %s64
      %p71 = scmp.eq.s32.totalorder %s21, 1
      %p72 = por %p70, %p71
      %p73 = scmp.ne.s32.totalorder %s64, %s65
      %p74 = scmp.eq.s32.totalorder %s21, 0
      %p75 = por %p73, %p74
      %p76 = scmp.ne.s32.totalorder %s64, %s65
      %p77 = scmp.eq.s32.totalorder %s22, 1
      %p78 = por %p76, %p77
      %p80 = scmp.ne.s32.totalorder %s65, %s79
      %p81 = scmp.eq.s32.totalorder %s22, 0
      %p82 = por %p80, %p81
      %s83 = sadd.s32 %s23, %s24
      %s84 = sadd.s32 %s35, %s31
      %s85 = ssub.s32 %s83, %s84
      %p86 = scmp.eq.s32.totalorder %s85, 0
      %s88 = sadd.s32 %s87, 1
      %s89 = scalar_select %p86, %s87, %s88
      %p92 = pneg %p86
      %p93 = scmp.eq.s32.totalorder %s16, 1
      %p94 = por %p92, %p93
      %p95 = scmp.ne.s32.totalorder %s87, %s90
      %p96 = scmp.eq.s32.totalorder %s16, 0
      %p97 = por %p95, %p96
      %p98 = scmp.ne.s32.totalorder %s87, %s90
      %p99 = scmp.eq.s32.totalorder %s21, 1
      %p100 = por %p98, %p99
      %p101 = scmp.ne.s32.totalorder %s90, %s91
      %p102 = scmp.eq.s32.totalorder %s21, 0
      %p103 = por %p101, %p102
      %p104 = scmp.ne.s32.totalorder %s90, %s91
      %p105 = scmp.eq.s32.totalorder %s22, 1
      %p106 = por %p104, %p105
      %p108 = scmp.ne.s32.totalorder %s91, %s107
      %p109 = scmp.eq.s32.totalorder %s22, 0
      %p110 = por %p108, %p109
      %s111 = sadd.s32 %s23, %s24
      %s112 = sadd.s32 %s35, %s31
      %s113 = ssub.s32 %s111, %s112
      %p114 = scmp.eq.s32.totalorder %s113, 0
      %s116 = sadd.s32 %s115, 1
      %s117 = scalar_select %p114, %s115, %s116
      %p120 = pneg %p114
      %p121 = scmp.eq.s32.totalorder %s16, 1
      %p122 = por %p120, %p121
      %p123 = scmp.ne.s32.totalorder %s115, %s118
      %p124 = scmp.eq.s32.totalorder %s16, 0
      %p125 = por %p123, %p124
      %p126 = scmp.ne.s32.totalorder %s115, %s118
      %p127 = scmp.eq.s32.totalorder %s21, 1
      %p128 = por %p126, %p127
      %p129 = scmp.ne.s32.totalorder %s118, %s119
      %p130 = scmp.eq.s32.totalorder %s21, 0
      %p131 = por %p129, %p130
      %p132 = scmp.ne.s32.totalorder %s118, %s119
      %p133 = scmp.eq.s32.totalorder %s22, 1
      %p134 = por %p132, %p133
      %p136 = scmp.ne.s32.totalorder %s119, %s135
      %p137 = scmp.eq.s32.totalorder %s22, 0
      %p138 = por %p136, %p137
      %p139 = scmp.le.s32.totalorder 1, %s16
      %p140 = scmp.lt.s32.totalorder %s16, 3
      %p141 = pnand %p139, %p140
      %p142 = pneg %p141
      // Predicated region
      $region9: #{tpu_custom_call.1} parent=5 // pred_check
        _
      $region10: #{tpu_custom_call.1} parent=5 // pred_check_branch
        %144 = sbr.rel (%p141) target = $region12
      $region11: #{tpu_custom_call.1} parent=5 // pred_region
        %s145 = ssub.s32 %s16, 1
        // Predicated region
        $region13: #{tpu_custom_call.1} parent=11 // pred_check
          %p146 = pneg %p54
        $region14: #{tpu_custom_call.1} parent=11 // pred_check_branch
          %148 = sbr.rel (%p146) target = $region16
        $region15: #{tpu_custom_call.1} parent=11 // pred_region
          %p149 = scmp.lt.s32.totalorder %s25, 1
          %s150 = scalar_select %p149, %s25, 1
          %s151 = smul.addr %s150, 48
          %s152 = smul.addr %s151, 4
          %s153 = scalar_lea.vmem %s0, %s152
        $region16: #{tpu_custom_call.1} parent=11 // pred_fallthru
          _
        // Predicated region
        $region17: #{tpu_custom_call.1} parent=11 // pred_check
          %p154 = pneg %p75
        $region18: #{tpu_custom_call.1} parent=11 // pred_check_branch
          %156 = sbr.rel (%p154) target = $region20
        $region19: #{tpu_custom_call.1} parent=11 // pred_region
          _
        $region20: #{tpu_custom_call.1} parent=11 // pred_fallthru
          _
      $region12: #{tpu_custom_call.1} parent=5 // pred_fallthru
        _
      %p157 = scmp.lt.s32.totalorder %s16, 2
      // Predicated region
      $region21: #{tpu_custom_call.1} parent=5 // pred_check
        %p158 = pneg %p157
      $region22: #{tpu_custom_call.1} parent=5 // pred_check_branch
        %160 = sbr.rel (%p158) target = $region24
      $region23: #{tpu_custom_call.1} parent=5 // pred_region
        _
      $region24: #{tpu_custom_call.1} parent=5 // pred_fallthru
        _
      %p161 = scmp.le.s32.totalorder 1, %s16
      %p162 = scmp.lt.s32.totalorder %s16, 3
      %p163 = pnand %p161, %p162
      %p164 = pneg %p163
      // Predicated region
      $region25: #{tpu_custom_call.1} parent=5 // pred_check
        _
      $region26: #{tpu_custom_call.1} parent=5 // pred_check_branch
        %166 = sbr.rel (%p163) target = $region28
      $region27: #{tpu_custom_call.1} parent=5 // pred_region
        %s167 = ssub.s32 %s16, 1
        %p168 = scmp.lt.s32.totalorder %s25, 1
        %s169 = scalar_select %p168, %s25, 1
        %s170 = smul.addr %s169, 48
        %s171 = smul.addr %s170, 4
        %s172 = scalar_lea.vmem %s0, %s171
        %p173 = pneg %p54
        %p174 = pneg %p51
        %p175 = pneg %p75
        %p176 = pneg %p72
        %p177 = pneg %p103
        %p178 = pneg %p100
        %s179 = sand.u32 %s90, 1
        %s180 = scalar_lea.sflag [#allocation3], %s179
        %s181 = sand.u32 %s90, 1
        %s182 = scalar_lea.vmem [#allocation2], %s181
        %p183 = pneg %p131
        %p184 = pneg %p128
        %s185 = sand.u32 %s118, 1
        %s186 = scalar_lea.sflag [#allocation5], %s185
        %s187 = sand.u32 %s118, 1
        %s188 = scalar_lea.vmem [#allocation4], %s187
        %p189 = scmp.lt.s32.totalorder %s25, 1
        %s190 = scalar_select %p189, %s25, 1
        %s191 = smul.addr %s190, 48
        %s192 = smul.addr %s191, 4
        %s193 = scalar_lea.vmem %s0, %s192
        %s194 = sadd.s32 %s25, %s26
        %s195 = sadd.s32 %s25, %s26
        %s197 = smul.u32 %s26, 14
        %s198 = smul.u32 %s197, 3
        %s199 = smul.addr %s198, 4
        %s200 = scalar_lea.vmem %s193, %s199
        %v201 = vld [vmem:[%s200] sm:$0xf]
        %v202 = vld [vmem:[%s200 + $0x4] sm:$0xf]
        %v203 = vld [vmem:[%s200 + $0xc] sm:$0xf]
        %v204 = vld [vmem:[%s200 + $0x10] sm:$0xf]
        %v205 = vld [vmem:[%s200 + $0x18] sm:$0xf]
        %v206 = vld [vmem:[%s200 + $0x1c] sm:$0xf]
        %v207 = vld [vmem:[%s200 + $0x24] sm:$0xf]
        %v208 = vld [vmem:[%s200 + $0x28] sm:$0xf]
        %v209 = vld [vmem:[%s200 + $0x30] sm:$0xf]
        %v210 = vld [vmem:[%s200 + $0x34] sm:$0xf]
        %v211 = vld [vmem:[%s200 + $0x3c] sm:$0xf]
        %v212 = vld [vmem:[%s200 + $0x40] sm:$0xf]
        %v213 = vld [vmem:[%s200 + $0x48] sm:$0xf]
        %v214 = vld [vmem:[%s200 + $0x4c] sm:$0xf]
        %v215 = vld [vmem:[%s200 + $0x54] sm:$0xf]
        %v216 = vld [vmem:[%s200 + $0x58] sm:$0xf]
        %v217 = vld [vmem:[%s200 + $0x60] sm:$0xf]
        %v218 = vld [vmem:[%s200 + $0x64] sm:$0xf]
        %v219 = vld [vmem:[%s200 + $0x6c] sm:$0xf]
        %v220 = vld [vmem:[%s200 + $0x70] sm:$0xf]
        %v221 = vld [vmem:[%s200 + $0x78] sm:$0xf]
        %v222 = vld [vmem:[%s200 + $0x7c] sm:$0xf]
        %v223 = vld [vmem:[%s200 + $0x84] sm:$0xf]
        %v224 = vld [vmem:[%s200 + $0x88] sm:$0xf]
        %v225 = vld [vmem:[%s200 + $0x90] sm:$0xf]
        %v226 = vld [vmem:[%s200 + $0x94] sm:$0xf]
        %v227 = vld [vmem:[%s200 + $0x9c] sm:$0xf]
        %v228 = vld [vmem:[%s200 + $0xa0] sm:$0xf]
        %v229 = vld [vmem:[%s200 + $0x8] sm:$0x1]
        %v230 = vld [vmem:[%s200 + $0x14] sm:$0x1]
        %v231 = vld [vmem:[%s200 + $0x20] sm:$0x1]
        %v232 = vld [vmem:[%s200 + $0x2c] sm:$0x1]
        %v233 = vld [vmem:[%s200 + $0x38] sm:$0x1]
        %v234 = vld [vmem:[%s200 + $0x44] sm:$0x1]
        %v235 = vld [vmem:[%s200 + $0x50] sm:$0x1]
        %v236 = vld [vmem:[%s200 + $0x5c] sm:$0x1]
        %v237 = vld [vmem:[%s200 + $0x68] sm:$0x1]
        %v238 = vld [vmem:[%s200 + $0x74] sm:$0x1]
        %v239 = vld [vmem:[%s200 + $0x80] sm:$0x1]
        %v240 = vld [vmem:[%s200 + $0x8c] sm:$0x1]
        %v241 = vld [vmem:[%s200 + $0x98] sm:$0x1]
        %v242 = vld [vmem:[%s200 + $0xa4] sm:$0x1]
        %v243 = vld [vmem:[%s200] sm:$0xe]
        %v244 = vld [vmem:[%s200 + $0xc] sm:$0xe]
        %v245 = vld [vmem:[%s200 + $0x18] sm:$0xe]
        %v246 = vld [vmem:[%s200 + $0x24] sm:$0xe]
        %v247 = vld [vmem:[%s200 + $0x30] sm:$0xe]
        %v248 = vld [vmem:[%s200 + $0x3c] sm:$0xe]
        %v249 = vld [vmem:[%s200 + $0x48] sm:$0xe]
        %v250 = vld [vmem:[%s200 + $0x54] sm:$0xe]
        %v251 = vld [vmem:[%s200 + $0x60] sm:$0xe]
        %v252 = vld [vmem:[%s200 + $0x6c] sm:$0xe]
        %v253 = vld [vmem:[%s200 + $0x78] sm:$0xe]
        %v254 = vld [vmem:[%s200 + $0x84] sm:$0xe]
        %v255 = vld [vmem:[%s200 + $0x90] sm:$0xe]
        %v256 = vld [vmem:[%s200 + $0x9c] sm:$0xe]
        %s257 = sadd.s32 %s197, 1
        %s258 = smul.u32 %s257, 3
        %s259 = smul.addr %s258, 4
        %s260 = scalar_lea.vmem %s193, %s259
        %v261 = vld [vmem:[%s260] sm:$0xf]
        %v262 = vld [vmem:[%s260 + $0x4] sm:$0xf]
        %v263 = vld [vmem:[%s260 + $0xc] sm:$0xf]
        %v264 = vld [vmem:[%s260 + $0x10] sm:$0xf]
        %v265 = vld [vmem:[%s260 + $0x18] sm:$0xf]
        %v266 = vld [vmem:[%s260 + $0x1c] sm:$0xf]
        %v267 = vld [vmem:[%s260 + $0x24] sm:$0xf]
        %v268 = vld [vmem:[%s260 + $0x28] sm:$0xf]
        %v269 = vld [vmem:[%s260 + $0x30] sm:$0xf]
        %v270 = vld [vmem:[%s260 + $0x34] sm:$0xf]
        %v271 = vld [vmem:[%s260 + $0x3c] sm:$0xf]
        %v272 = vld [vmem:[%s260 + $0x40] sm:$0xf]
        %v273 = vld [vmem:[%s260 + $0x48] sm:$0xf]
        %v274 = vld [vmem:[%s260 + $0x4c] sm:$0xf]
        %v275 = vld [vmem:[%s260 + $0x54] sm:$0xf]
        %v276 = vld [vmem:[%s260 + $0x58] sm:$0xf]
        %v277 = vld [vmem:[%s260 + $0x60] sm:$0xf]
        %v278 = vld [vmem:[%s260 + $0x64] sm:$0xf]
        %v279 = vld [vmem:[%s260 + $0x6c] sm:$0xf]
        %v280 = vld [vmem:[%s260 + $0x70] sm:$0xf]
        %v281 = vld [vmem:[%s260 + $0x78] sm:$0xf]
        %v282 = vld [vmem:[%s260 + $0x7c] sm:$0xf]
        %v283 = vld [vmem:[%s260 + $0x84] sm:$0xf]
        %v284 = vld [vmem:[%s260 + $0x88] sm:$0xf]
        %v285 = vld [vmem:[%s260 + $0x90] sm:$0xf]
        %v286 = vld [vmem:[%s260 + $0x94] sm:$0xf]
        %v287 = vld [vmem:[%s260 + $0x9c] sm:$0xf]
        %v288 = vld [vmem:[%s260 + $0xa0] sm:$0xf]
        %v289 = vld [vmem:[%s260 + $0x8] sm:$0x1]
        %v290 = vld [vmem:[%s260 + $0x14] sm:$0x1]
        %v291 = vld [vmem:[%s260 + $0x20] sm:$0x1]
        %v292 = vld [vmem:[%s260 + $0x2c] sm:$0x1]
        %v293 = vld [vmem:[%s260 + $0x38] sm:$0x1]
        %v294 = vld [vmem:[%s260 + $0x44] sm:$0x1]
        %v295 = vld [vmem:[%s260 + $0x50] sm:$0x1]
        %v296 = vld [vmem:[%s260 + $0x5c] sm:$0x1]
        %v297 = vld [vmem:[%s260 + $0x68] sm:$0x1]
        %v298 = vld [vmem:[%s260 + $0x74] sm:$0x1]
        %v299 = vld [vmem:[%s260 + $0x80] sm:$0x1]
        %v300 = vld [vmem:[%s260 + $0x8c] sm:$0x1]
        %v301 = vld [vmem:[%s260 + $0x98] sm:$0x1]
        %v302 = vld [vmem:[%s260 + $0xa4] sm:$0x1]
        %v303 = vld [vmem:[%s260] sm:$0xe]
        %v304 = vld [vmem:[%s260 + $0xc] sm:$0xe]
        %v305 = vld [vmem:[%s260 + $0x18] sm:$0xe]
        %v306 = vld [vmem:[%s260 + $0x24] sm:$0xe]
        %v307 = vld [vmem:[%s260 + $0x30] sm:$0xe]
        %v308 = vld [vmem:[%s260 + $0x3c] sm:$0xe]
        %v309 = vld [vmem:[%s260 + $0x48] sm:$0xe]
        %v310 = vld [vmem:[%s260 + $0x54] sm:$0xe]
        %v311 = vld [vmem:[%s260 + $0x60] sm:$0xe]
        %v312 = vld [vmem:[%s260 + $0x6c] sm:$0xe]
        %v313 = vld [vmem:[%s260 + $0x78] sm:$0xe]
        %v314 = vld [vmem:[%s260 + $0x84] sm:$0xe]
        %v315 = vld [vmem:[%s260 + $0x90] sm:$0xe]
        %v316 = vld [vmem:[%s260 + $0x9c] sm:$0xe]
        %s317 = sadd.s32 %s197, 2
        %s318 = smul.u32 %s317, 3
        %s319 = smul.addr %s318, 4
        %s320 = scalar_lea.vmem %s193, %s319
        %v321 = vld [vmem:[%s320] sm:$0xf]
        %v322 = vld [vmem:[%s320 + $0x4] sm:$0xf]
        %v323 = vld [vmem:[%s320 + $0xc] sm:$0xf]
        %v324 = vld [vmem:[%s320 + $0x10] sm:$0xf]
        %v325 = vld [vmem:[%s320 + $0x18] sm:$0xf]
        %v326 = vld [vmem:[%s320 + $0x1c] sm:$0xf]
        %v327 = vld [vmem:[%s320 + $0x24] sm:$0xf]
        %v328 = vld [vmem:[%s320 + $0x28] sm:$0xf]
        %v329 = vld [vmem:[%s320 + $0x30] sm:$0xf]
        %v330 = vld [vmem:[%s320 + $0x34] sm:$0xf]
        %v331 = vld [vmem:[%s320 + $0x3c] sm:$0xf]
        %v332 = vld [vmem:[%s320 + $0x40] sm:$0xf]
        %v333 = vld [vmem:[%s320 + $0x48] sm:$0xf]
        %v334 = vld [vmem:[%s320 + $0x4c] sm:$0xf]
        %v335 = vld [vmem:[%s320 + $0x54] sm:$0xf]
        %v336 = vld [vmem:[%s320 + $0x58] sm:$0xf]
        %v337 = vld [vmem:[%s320 + $0x60] sm:$0xf]
        %v338 = vld [vmem:[%s320 + $0x64] sm:$0xf]
        %v339 = vld [vmem:[%s320 + $0x6c] sm:$0xf]
        %v340 = vld [vmem:[%s320 + $0x70] sm:$0xf]
        %v341 = vld [vmem:[%s320 + $0x78] sm:$0xf]
        %v342 = vld [vmem:[%s320 + $0x7c] sm:$0xf]
        %v343 = vld [vmem:[%s320 + $0x84] sm:$0xf]
        %v344 = vld [vmem:[%s320 + $0x88] sm:$0xf]
        %v345 = vld [vmem:[%s320 + $0x90] sm:$0xf]
        %v346 = vld [vmem:[%s320 + $0x94] sm:$0xf]
        %v347 = vld [vmem:[%s320 + $0x9c] sm:$0xf]
        %v348 = vld [vmem:[%s320 + $0xa0] sm:$0xf]
        %v349 = vld [vmem:[%s320 + $0x8] sm:$0x1]
        %v350 = vld [vmem:[%s320 + $0x14] sm:$0x1]
        %v351 = vld [vmem:[%s320 + $0x20] sm:$0x1]
        %v352 = vld [vmem:[%s320 + $0x2c] sm:$0x1]
        %v353 = vld [vmem:[%s320 + $0x38] sm:$0x1]
        %v354 = vld [vmem:[%s320 + $0x44] sm:$0x1]
        %v355 = vld [vmem:[%s320 + $0x50] sm:$0x1]
        %v356 = vld [vmem:[%s320 + $0x5c] sm:$0x1]
        %v357 = vld [vmem:[%s320 + $0x68] sm:$0x1]
        %v358 = vld [vmem:[%s320 + $0x74] sm:$0x1]
        %v359 = vld [vmem:[%s320 + $0x80] sm:$0x1]
        %v360 = vld [vmem:[%s320 + $0x8c] sm:$0x1]
        %v361 = vld [vmem:[%s320 + $0x98] sm:$0x1]
        %v362 = vld [vmem:[%s320 + $0xa4] sm:$0x1]
        %v363 = vld [vmem:[%s320] sm:$0xe]
        %v364 = vld [vmem:[%s320 + $0xc] sm:$0xe]
        %v365 = vld [vmem:[%s320 + $0x18] sm:$0xe]
        %v366 = vld [vmem:[%s320 + $0x24] sm:$0xe]
        %v367 = vld [vmem:[%s320 + $0x30] sm:$0xe]
        %v368 = vld [vmem:[%s320 + $0x3c] sm:$0xe]
        %v369 = vld [vmem:[%s320 + $0x48] sm:$0xe]
        %v370 = vld [vmem:[%s320 + $0x54] sm:$0xe]
        %v371 = vld [vmem:[%s320 + $0x60] sm:$0xe]
        %v372 = vld [vmem:[%s320 + $0x6c] sm:$0xe]
        %v373 = vld [vmem:[%s320 + $0x78] sm:$0xe]
        %v374 = vld [vmem:[%s320 + $0x84] sm:$0xe]
        %v375 = vld [vmem:[%s320 + $0x90] sm:$0xe]
        %v376 = vld [vmem:[%s320 + $0x9c] sm:$0xe]
        %v405 = vunpack.c.l.b16 %v201
        %v406 = vunpack.c.l.b16 %v202
        %v407 = vunpack.c.l.b16 %v203
        %v408 = vunpack.c.l.b16 %v204
        %v409 = vunpack.c.l.b16 %v205
        %v410 = vunpack.c.l.b16 %v206
        %v411 = vunpack.c.l.b16 %v207
        %v412 = vunpack.c.l.b16 %v208
        %v413 = vunpack.c.l.b16 %v209
        %v414 = vunpack.c.l.b16 %v210
        %v415 = vunpack.c.l.b16 %v211
        %v416 = vunpack.c.l.b16 %v212
        %v417 = vunpack.c.l.b16 %v213
        %v418 = vunpack.c.l.b16 %v214
        %v419 = vunpack.c.l.b16 %v215
        %v420 = vunpack.c.l.b16 %v216
        %v421 = vunpack.c.l.b16 %v217
        %v422 = vunpack.c.l.b16 %v218
        %v423 = vunpack.c.l.b16 %v219
        %v424 = vunpack.c.l.b16 %v220
        %v425 = vunpack.c.l.b16 %v221
        %v426 = vunpack.c.l.b16 %v222
        %v427 = vunpack.c.l.b16 %v223
        %v428 = vunpack.c.l.b16 %v224
        %v429 = vunpack.c.l.b16 %v225
        %v430 = vunpack.c.l.b16 %v226
        %v431 = vunpack.c.l.b16 %v227
        %v432 = vunpack.c.l.b16 %v228
        %v433 = vpack.c.b16 %v406, %v405
        %v434 = vpack.c.b16 %v408, %v407
        %v435 = vpack.c.b16 %v410, %v409
        %v436 = vpack.c.b16 %v412, %v411
        %v437 = vpack.c.b16 %v414, %v413
        %v438 = vpack.c.b16 %v416, %v415
        %v439 = vpack.c.b16 %v418, %v417
        %v440 = vpack.c.b16 %v420, %v419
        %v441 = vpack.c.b16 %v422, %v421
        %v442 = vpack.c.b16 %v424, %v423
        %v443 = vpack.c.b16 %v426, %v425
        %v444 = vpack.c.b16 %v428, %v427
        %v445 = vpack.c.b16 %v430, %v429
        %v446 = vpack.c.b16 %v432, %v431
        %v461 = vunpack.c.l.b16 %v229
        %v462 = vunpack.c.l.b16 %v230
        %v463 = vunpack.c.l.b16 %v231
        %v464 = vunpack.c.l.b16 %v232
        %v465 = vunpack.c.l.b16 %v233
        %v466 = vunpack.c.l.b16 %v234
        %v467 = vunpack.c.l.b16 %v235
        %v468 = vunpack.c.l.b16 %v236
        %v469 = vunpack.c.l.b16 %v237
        %v470 = vunpack.c.l.b16 %v238
        %v471 = vunpack.c.l.b16 %v239
        %v472 = vunpack.c.l.b16 %v240
        %v473 = vunpack.c.l.b16 %v241
        %v474 = vunpack.c.l.b16 %v242
        %v475 = vpack.c.b16 %v461, %v461
        %v476 = vpack.c.b16 %v462, %v462
        %v477 = vpack.c.b16 %v463, %v463
        %v478 = vpack.c.b16 %v464, %v464
        %v479 = vpack.c.b16 %v465, %v465
        %v480 = vpack.c.b16 %v466, %v466
        %v481 = vpack.c.b16 %v467, %v467
        %v482 = vpack.c.b16 %v468, %v468
        %v483 = vpack.c.b16 %v469, %v469
        %v484 = vpack.c.b16 %v470, %v470
        %v485 = vpack.c.b16 %v471, %v471
        %v486 = vpack.c.b16 %v472, %v472
        %v487 = vpack.c.b16 %v473, %v473
        %v488 = vpack.c.b16 %v474, %v474
        %vm489 = vsmask.f32 7424
        %v491 = vshrl.u32 %v433, 16
        %v493 = vshll.u32 %v433, 16
        %v495 = vrot.slane %v493, 1
        %v496 = vor.u32 %v491, %v495
        %v498 = vshll.u32 %v475, 16
        %v500 = vrot.slane %v498, 1
        %v501 = vsel %vm489, %v496, %v500
        %v503 = vshrl.u32 %v434, 16
        %v505 = vshll.u32 %v434, 16
        %v507 = vrot.slane %v505, 1
        %v508 = vor.u32 %v503, %v507
        %v510 = vshll.u32 %v476, 16
        %v512 = vrot.slane %v510, 1
        %v513 = vsel %vm489, %v508, %v512
        %v515 = vshrl.u32 %v435, 16
        %v517 = vshll.u32 %v435, 16
        %v519 = vrot.slane %v517, 1
        %v520 = vor.u32 %v515, %v519
        %v522 = vshll.u32 %v477, 16
        %v524 = vrot.slane %v522, 1
        %v525 = vsel %vm489, %v520, %v524
        %v527 = vshrl.u32 %v436, 16
        %v529 = vshll.u32 %v436, 16
        %v531 = vrot.slane %v529, 1
        %v532 = vor.u32 %v527, %v531
        %v534 = vshll.u32 %v478, 16
        %v536 = vrot.slane %v534, 1
        %v537 = vsel %vm489, %v532, %v536
        %v539 = vshrl.u32 %v437, 16
        %v541 = vshll.u32 %v437, 16
        %v543 = vrot.slane %v541, 1
        %v544 = vor.u32 %v539, %v543
        %v546 = vshll.u32 %v479, 16
        %v548 = vrot.slane %v546, 1
        %v549 = vsel %vm489, %v544, %v548
        %v551 = vshrl.u32 %v438, 16
        %v553 = vshll.u32 %v438, 16
        %v555 = vrot.slane %v553, 1
        %v556 = vor.u32 %v551, %v555
        %v558 = vshll.u32 %v480, 16
        %v560 = vrot.slane %v558, 1
        %v561 = vsel %vm489, %v556, %v560
        %v563 = vshrl.u32 %v439, 16
        %v565 = vshll.u32 %v439, 16
        %v567 = vrot.slane %v565, 1
        %v568 = vor.u32 %v563, %v567
        %v570 = vshll.u32 %v481, 16
        %v572 = vrot.slane %v570, 1
        %v573 = vsel %vm489, %v568, %v572
        %v575 = vshrl.u32 %v440, 16
        %v577 = vshll.u32 %v440, 16
        %v579 = vrot.slane %v577, 1
        %v580 = vor.u32 %v575, %v579
        %v582 = vshll.u32 %v482, 16
        %v584 = vrot.slane %v582, 1
        %v585 = vsel %vm489, %v580, %v584
        %v587 = vshrl.u32 %v441, 16
        %v589 = vshll.u32 %v441, 16
        %v591 = vrot.slane %v589, 1
        %v592 = vor.u32 %v587, %v591
        %v594 = vshll.u32 %v483, 16
        %v596 = vrot.slane %v594, 1
        %v597 = vsel %vm489, %v592, %v596
        %v599 = vshrl.u32 %v442, 16
        %v601 = vshll.u32 %v442, 16
        %v603 = vrot.slane %v601, 1
        %v604 = vor.u32 %v599, %v603
        %v606 = vshll.u32 %v484, 16
        %v608 = vrot.slane %v606, 1
        %v609 = vsel %vm489, %v604, %v608
        %v611 = vshrl.u32 %v443, 16
        %v613 = vshll.u32 %v443, 16
        %v615 = vrot.slane %v613, 1
        %v616 = vor.u32 %v611, %v615
        %v618 = vshll.u32 %v485, 16
        %v620 = vrot.slane %v618, 1
        %v621 = vsel %vm489, %v616, %v620
        %v623 = vshrl.u32 %v444, 16
        %v625 = vshll.u32 %v444, 16
        %v627 = vrot.slane %v625, 1
        %v628 = vor.u32 %v623, %v627
        %v630 = vshll.u32 %v486, 16
        %v632 = vrot.slane %v630, 1
        %v633 = vsel %vm489, %v628, %v632
        %v635 = vshrl.u32 %v445, 16
        %v637 = vshll.u32 %v445, 16
        %v639 = vrot.slane %v637, 1
        %v640 = vor.u32 %v635, %v639
        %v642 = vshll.u32 %v487, 16
        %v644 = vrot.slane %v642, 1
        %v645 = vsel %vm489, %v640, %v644
        %v647 = vshrl.u32 %v446, 16
        %v649 = vshll.u32 %v446, 16
        %v651 = vrot.slane %v649, 1
        %v652 = vor.u32 %v647, %v651
        %v654 = vshll.u32 %v488, 16
        %v656 = vrot.slane %v654, 1
        %v657 = vsel %vm489, %v652, %v656
        %658 = vrot.lane.b32.xlu0 %v501, 8
        %v659 = vpop.permute.xlu0 %658
        %660 = vrot.lane.b32.xlu0 %v513, 8
        %v661 = vpop.permute.xlu0 %660
        %662 = vrot.lane.b32.xlu0 %v525, 8
        %v663 = vpop.permute.xlu0 %662
        %664 = vrot.lane.b32.xlu0 %v537, 8
        %v665 = vpop.permute.xlu0 %664
        %666 = vrot.lane.b32.xlu0 %v549, 8
        %v667 = vpop.permute.xlu0 %666
        %668 = vrot.lane.b32.xlu0 %v561, 8
        %v669 = vpop.permute.xlu0 %668
        %670 = vrot.lane.b32.xlu0 %v573, 8
        %v671 = vpop.permute.xlu0 %670
        %672 = vrot.lane.b32.xlu0 %v585, 8
        %v673 = vpop.permute.xlu0 %672
        %674 = vrot.lane.b32.xlu0 %v597, 8
        %v675 = vpop.permute.xlu0 %674
        %676 = vrot.lane.b32.xlu0 %v609, 8
        %v677 = vpop.permute.xlu0 %676
        %678 = vrot.lane.b32.xlu0 %v621, 8
        %v679 = vpop.permute.xlu0 %678
        %680 = vrot.lane.b32.xlu0 %v633, 8
        %v681 = vpop.permute.xlu0 %680
        %682 = vrot.lane.b32.xlu0 %v645, 8
        %v683 = vpop.permute.xlu0 %682
        %684 = vrot.lane.b32.xlu0 %v657, 8
        %v685 = vpop.permute.xlu0 %684
        %v700 = vunpack.c.l.b16 %v243
        %v701 = vunpack.c.l.b16 %v244
        %v702 = vunpack.c.l.b16 %v245
        %v703 = vunpack.c.l.b16 %v246
        %v704 = vunpack.c.l.b16 %v247
        %v705 = vunpack.c.l.b16 %v248
        %v706 = vunpack.c.l.b16 %v249
        %v707 = vunpack.c.l.b16 %v250
        %v708 = vunpack.c.l.b16 %v251
        %v709 = vunpack.c.l.b16 %v252
        %v710 = vunpack.c.l.b16 %v253
        %v711 = vunpack.c.l.b16 %v254
        %v712 = vunpack.c.l.b16 %v255
        %v713 = vunpack.c.l.b16 %v256
        %v714 = vpack.c.b16 %v406, %v700
        %v715 = vpack.c.b16 %v408, %v701
        %v716 = vpack.c.b16 %v410, %v702
        %v717 = vpack.c.b16 %v412, %v703
        %v718 = vpack.c.b16 %v414, %v704
        %v719 = vpack.c.b16 %v416, %v705
        %v720 = vpack.c.b16 %v418, %v706
        %v721 = vpack.c.b16 %v420, %v707
        %v722 = vpack.c.b16 %v422, %v708
        %v723 = vpack.c.b16 %v424, %v709
        %v724 = vpack.c.b16 %v426, %v710
        %v725 = vpack.c.b16 %v428, %v711
        %v726 = vpack.c.b16 %v430, %v712
        %v727 = vpack.c.b16 %v432, %v713
        %vm728 = vcmask 1046528
        %v729 = vrot.slane %v714, 1
        %v730 = vrot.slane %v475, 1
        %v731 = vsel %vm728, %v729, %v730
        %v732 = vrot.slane %v715, 1
        %v733 = vrot.slane %v476, 1
        %v734 = vsel %vm728, %v732, %v733
        %v735 = vrot.slane %v716, 1
        %v736 = vrot.slane %v477, 1
        %v737 = vsel %vm728, %v735, %v736
        %v738 = vrot.slane %v717, 1
        %v739 = vrot.slane %v478, 1
        %v740 = vsel %vm728, %v738, %v739
        %v741 = vrot.slane %v718, 1
        %v742 = vrot.slane %v479, 1
        %v743 = vsel %vm728, %v741, %v742
        %v744 = vrot.slane %v719, 1
        %v745 = vrot.slane %v480, 1
        %v746 = vsel %vm728, %v744, %v745
        %v747 = vrot.slane %v720, 1
        %v748 = vrot.slane %v481, 1
        %v749 = vsel %vm728, %v747, %v748
        %v750 = vrot.slane %v721, 1
        %v751 = vrot.slane %v482, 1
        %v752 = vsel %vm728, %v750, %v751
        %v753 = vrot.slane %v722, 1
        %v754 = vrot.slane %v483, 1
        %v755 = vsel %vm728, %v753, %v754
        %v756 = vrot.slane %v723, 1
        %v757 = vrot.slane %v484, 1
        %v758 = vsel %vm728, %v756, %v757
        %v759 = vrot.slane %v724, 1
        %v760 = vrot.slane %v485, 1
        %v761 = vsel %vm728, %v759, %v760
        %v762 = vrot.slane %v725, 1
        %v763 = vrot.slane %v486, 1
        %v764 = vsel %vm728, %v762, %v763
        %v765 = vrot.slane %v726, 1
        %v766 = vrot.slane %v487, 1
        %v767 = vsel %vm728, %v765, %v766
        %v768 = vrot.slane %v727, 1
        %v769 = vrot.slane %v488, 1
        %v770 = vsel %vm728, %v768, %v769
        %771 = vrot.lane.b32.xlu0 %v731, 16
        %v772 = vpop.permute.xlu0 %771
        %773 = vrot.lane.b32.xlu0 %v734, 16
        %v774 = vpop.permute.xlu0 %773
        %775 = vrot.lane.b32.xlu0 %v737, 16
        %v776 = vpop.permute.xlu0 %775
        %777 = vrot.lane.b32.xlu0 %v740, 16
        %v778 = vpop.permute.xlu0 %777
        %779 = vrot.lane.b32.xlu0 %v743, 16
        %v780 = vpop.permute.xlu0 %779
        %781 = vrot.lane.b32.xlu0 %v746, 16
        %v782 = vpop.permute.xlu0 %781
        %783 = vrot.lane.b32.xlu0 %v749, 16
        %v784 = vpop.permute.xlu0 %783
        %785 = vrot.lane.b32.xlu0 %v752, 16
        %v786 = vpop.permute.xlu0 %785
        %787 = vrot.lane.b32.xlu0 %v755, 16
        %v788 = vpop.permute.xlu0 %787
        %789 = vrot.lane.b32.xlu0 %v758, 16
        %v790 = vpop.permute.xlu0 %789
        %791 = vrot.lane.b32.xlu0 %v761, 16
        %v792 = vpop.permute.xlu0 %791
        %793 = vrot.lane.b32.xlu0 %v764, 16
        %v794 = vpop.permute.xlu0 %793
        %795 = vrot.lane.b32.xlu0 %v767, 16
        %v796 = vpop.permute.xlu0 %795
        %797 = vrot.lane.b32.xlu0 %v770, 16
        %v798 = vpop.permute.xlu0 %797
        %v827 = vunpack.c.l.b16 %v261
        %v828 = vunpack.c.l.b16 %v262
        %v829 = vunpack.c.l.b16 %v263
        %v830 = vunpack.c.l.b16 %v264
        %v831 = vunpack.c.l.b16 %v265
        %v832 = vunpack.c.l.b16 %v266
        %v833 = vunpack.c.l.b16 %v267
        %v834 = vunpack.c.l.b16 %v268
        %v835 = vunpack.c.l.b16 %v269
        %v836 = vunpack.c.l.b16 %v270
        %v837 = vunpack.c.l.b16 %v271
        %v838 = vunpack.c.l.b16 %v272
        %v839 = vunpack.c.l.b16 %v273
        %v840 = vunpack.c.l.b16 %v274
        %v841 = vunpack.c.l.b16 %v275
        %v842 = vunpack.c.l.b16 %v276
        %v843 = vunpack.c.l.b16 %v277
        %v844 = vunpack.c.l.b16 %v278
        %v845 = vunpack.c.l.b16 %v279
        %v846 = vunpack.c.l.b16 %v280
        %v847 = vunpack.c.l.b16 %v281
        %v848 = vunpack.c.l.b16 %v282
        %v849 = vunpack.c.l.b16 %v283
        %v850 = vunpack.c.l.b16 %v284
        %v851 = vunpack.c.l.b16 %v285
        %v852 = vunpack.c.l.b16 %v286
        %v853 = vunpack.c.l.b16 %v287
        %v854 = vunpack.c.l.b16 %v288
        %v855 = vpack.c.b16 %v828, %v827
        %v856 = vpack.c.b16 %v830, %v829
        %v857 = vpack.c.b16 %v832, %v831
        %v858 = vpack.c.b16 %v834, %v833
        %v859 = vpack.c.b16 %v836, %v835
        %v860 = vpack.c.b16 %v838, %v837
        %v861 = vpack.c.b16 %v840, %v839
        %v862 = vpack.c.b16 %v842, %v841
        %v863 = vpack.c.b16 %v844, %v843
        %v864 = vpack.c.b16 %v846, %v845
        %v865 = vpack.c.b16 %v848, %v847
        %v866 = vpack.c.b16 %v850, %v849
        %v867 = vpack.c.b16 %v852, %v851
        %v868 = vpack.c.b16 %v854, %v853
        %869 = vrot.lane.b32.xlu0 %v855, 24
        %v870 = vpop.permute.xlu0 %869
        %871 = vrot.lane.b32.xlu0 %v856, 24
        %v872 = vpop.permute.xlu0 %871
        %873 = vrot.lane.b32.xlu0 %v857, 24
        %v874 = vpop.permute.xlu0 %873
        %875 = vrot.lane.b32.xlu0 %v858, 24
        %v876 = vpop.permute.xlu0 %875
        %877 = vrot.lane.b32.xlu0 %v859, 24
        %v878 = vpop.permute.xlu0 %877
        %879 = vrot.lane.b32.xlu0 %v860, 24
        %v880 = vpop.permute.xlu0 %879
        %881 = vrot.lane.b32.xlu0 %v861, 24
        %v882 = vpop.permute.xlu0 %881
        %883 = vrot.lane.b32.xlu0 %v862, 24
        %v884 = vpop.permute.xlu0 %883
        %885 = vrot.lane.b32.xlu0 %v863, 24
        %v886 = vpop.permute.xlu0 %885
        %887 = vrot.lane.b32.xlu0 %v864, 24
        %v888 = vpop.permute.xlu0 %887
        %889 = vrot.lane.b32.xlu0 %v865, 24
        %v890 = vpop.permute.xlu0 %889
        %891 = vrot.lane.b32.xlu0 %v866, 24
        %v892 = vpop.permute.xlu0 %891
        %893 = vrot.lane.b32.xlu0 %v867, 24
        %v894 = vpop.permute.xlu0 %893
        %895 = vrot.lane.b32.xlu0 %v868, 24
        %v896 = vpop.permute.xlu0 %895
        %v911 = vunpack.c.l.b16 %v289
        %v912 = vunpack.c.l.b16 %v290
        %v913 = vunpack.c.l.b16 %v291
        %v914 = vunpack.c.l.b16 %v292
        %v915 = vunpack.c.l.b16 %v293
        %v916 = vunpack.c.l.b16 %v294
        %v917 = vunpack.c.l.b16 %v295
        %v918 = vunpack.c.l.b16 %v296
        %v919 = vunpack.c.l.b16 %v297
        %v920 = vunpack.c.l.b16 %v298
        %v921 = vunpack.c.l.b16 %v299
        %v922 = vunpack.c.l.b16 %v300
        %v923 = vunpack.c.l.b16 %v301
        %v924 = vunpack.c.l.b16 %v302
        %v925 = vpack.c.b16 %v911, %v911
        %v926 = vpack.c.b16 %v912, %v912
        %v927 = vpack.c.b16 %v913, %v913
        %v928 = vpack.c.b16 %v914, %v914
        %v929 = vpack.c.b16 %v915, %v915
        %v930 = vpack.c.b16 %v916, %v916
        %v931 = vpack.c.b16 %v917, %v917
        %v932 = vpack.c.b16 %v918, %v918
        %v933 = vpack.c.b16 %v919, %v919
        %v934 = vpack.c.b16 %v920, %v920
        %v935 = vpack.c.b16 %v921, %v921
        %v936 = vpack.c.b16 %v922, %v922
        %v937 = vpack.c.b16 %v923, %v923
        %v938 = vpack.c.b16 %v924, %v924
        %v940 = vshrl.u32 %v855, 16
        %v942 = vshll.u32 %v855, 16
        %v944 = vrot.slane %v942, 1
        %v945 = vor.u32 %v940, %v944
        %v947 = vshll.u32 %v925, 16
        %v949 = vrot.slane %v947, 1
        %v950 = vsel %vm489, %v945, %v949
        %v952 = vshrl.u32 %v856, 16
        %v954 = vshll.u32 %v856, 16
        %v956 = vrot.slane %v954, 1
        %v957 = vor.u32 %v952, %v956
        %v959 = vshll.u32 %v926, 16
        %v961 = vrot.slane %v959, 1
        %v962 = vsel %vm489, %v957, %v961
        %v964 = vshrl.u32 %v857, 16
        %v966 = vshll.u32 %v857, 16
        %v968 = vrot.slane %v966, 1
        %v969 = vor.u32 %v964, %v968
        %v971 = vshll.u32 %v927, 16
        %v973 = vrot.slane %v971, 1
        %v974 = vsel %vm489, %v969, %v973
        %v976 = vshrl.u32 %v858, 16
        %v978 = vshll.u32 %v858, 16
        %v980 = vrot.slane %v978, 1
        %v981 = vor.u32 %v976, %v980
        %v983 = vshll.u32 %v928, 16
        %v985 = vrot.slane %v983, 1
        %v986 = vsel %vm489, %v981, %v985
        %v988 = vshrl.u32 %v859, 16
        %v990 = vshll.u32 %v859, 16
        %v992 = vrot.slane %v990, 1
        %v993 = vor.u32 %v988, %v992
        %v995 = vshll.u32 %v929, 16
        %v997 = vrot.slane %v995, 1
        %v998 = vsel %vm489, %v993, %v997
        %v1000 = vshrl.u32 %v860, 16
        %v1002 = vshll.u32 %v860, 16
        %v1004 = vrot.slane %v1002, 1
        %v1005 = vor.u32 %v1000, %v1004
        %v1007 = vshll.u32 %v930, 16
        %v1009 = vrot.slane %v1007, 1
        %v1010 = vsel %vm489, %v1005, %v1009
        %v1012 = vshrl.u32 %v861, 16
        %v1014 = vshll.u32 %v861, 16
        %v1016 = vrot.slane %v1014, 1
        %v1017 = vor.u32 %v1012, %v1016
        %v1019 = vshll.u32 %v931, 16
        %v1021 = vrot.slane %v1019, 1
        %v1022 = vsel %vm489, %v1017, %v1021
        %v1024 = vshrl.u32 %v862, 16
        %v1026 = vshll.u32 %v862, 16
        %v1028 = vrot.slane %v1026, 1
        %v1029 = vor.u32 %v1024, %v1028
        %v1031 = vshll.u32 %v932, 16
        %v1033 = vrot.slane %v1031, 1
        %v1034 = vsel %vm489, %v1029, %v1033
        %v1036 = vshrl.u32 %v863, 16
        %v1038 = vshll.u32 %v863, 16
        %v1040 = vrot.slane %v1038, 1
        %v1041 = vor.u32 %v1036, %v1040
        %v1043 = vshll.u32 %v933, 16
        %v1045 = vrot.slane %v1043, 1
        %v1046 = vsel %vm489, %v1041, %v1045
        %v1048 = vshrl.u32 %v864, 16
        %v1050 = vshll.u32 %v864, 16
        %v1052 = vrot.slane %v1050, 1
        %v1053 = vor.u32 %v1048, %v1052
        %v1055 = vshll.u32 %v934, 16
        %v1057 = vrot.slane %v1055, 1
        %v1058 = vsel %vm489, %v1053, %v1057
        %v1060 = vshrl.u32 %v865, 16
        %v1062 = vshll.u32 %v865, 16
        %v1064 = vrot.slane %v1062, 1
        %v1065 = vor.u32 %v1060, %v1064
        %v1067 = vshll.u32 %v935, 16
        %v1069 = vrot.slane %v1067, 1
        %v1070 = vsel %vm489, %v1065, %v1069
        %v1072 = vshrl.u32 %v866, 16
        %v1074 = vshll.u32 %v866, 16
        %v1076 = vrot.slane %v1074, 1
        %v1077 = vor.u32 %v1072, %v1076
        %v1079 = vshll.u32 %v936, 16
        %v1081 = vrot.slane %v1079, 1
        %v1082 = vsel %vm489, %v1077, %v1081
        %v1084 = vshrl.u32 %v867, 16
        %v1086 = vshll.u32 %v867, 16
        %v1088 = vrot.slane %v1086, 1
        %v1089 = vor.u32 %v1084, %v1088
        %v1091 = vshll.u32 %v937, 16
        %v1093 = vrot.slane %v1091, 1
        %v1094 = vsel %vm489, %v1089, %v1093
        %v1096 = vshrl.u32 %v868, 16
        %v1098 = vshll.u32 %v868, 16
        %v1100 = vrot.slane %v1098, 1
        %v1101 = vor.u32 %v1096, %v1100
        %v1103 = vshll.u32 %v938, 16
        %v1105 = vrot.slane %v1103, 1
        %v1106 = vsel %vm489, %v1101, %v1105
        %1107 = vrot.lane.b32.xlu0 %v950, 32
        %v1108 = vpop.permute.xlu0 %1107
        %1109 = vrot.lane.b32.xlu0 %v962, 32
        %v1110 = vpop.permute.xlu0 %1109
        %1111 = vrot.lane.b32.xlu0 %v974, 32
        %v1112 = vpop.permute.xlu0 %1111
        %1113 = vrot.lane.b32.xlu0 %v986, 32
        %v1114 = vpop.permute.xlu0 %1113
        %1115 = vrot.lane.b32.xlu0 %v998, 32
        %v1116 = vpop.permute.xlu0 %1115
        %1117 = vrot.lane.b32.xlu0 %v1010, 32
        %v1118 = vpop.permute.xlu0 %1117
        %1119 = vrot.lane.b32.xlu0 %v1022, 32
        %v1120 = vpop.permute.xlu0 %1119
        %1121 = vrot.lane.b32.xlu0 %v1034, 32
        %v1122 = vpop.permute.xlu0 %1121
        %1123 = vrot.lane.b32.xlu0 %v1046, 32
        %v1124 = vpop.permute.xlu0 %1123
        %1125 = vrot.lane.b32.xlu0 %v1058, 32
        %v1126 = vpop.permute.xlu0 %1125
        %1127 = vrot.lane.b32.xlu0 %v1070, 32
        %v1128 = vpop.permute.xlu0 %1127
        %1129 = vrot.lane.b32.xlu0 %v1082, 32
        %v1130 = vpop.permute.xlu0 %1129
        %1131 = vrot.lane.b32.xlu0 %v1094, 32
        %v1132 = vpop.permute.xlu0 %1131
        %1133 = vrot.lane.b32.xlu0 %v1106, 32
        %v1134 = vpop.permute.xlu0 %1133
        %v1149 = vunpack.c.l.b16 %v303
        %v1150 = vunpack.c.l.b16 %v304
        %v1151 = vunpack.c.l.b16 %v305
        %v1152 = vunpack.c.l.b16 %v306
        %v1153 = vunpack.c.l.b16 %v307
        %v1154 = vunpack.c.l.b16 %v308
        %v1155 = vunpack.c.l.b16 %v309
        %v1156 = vunpack.c.l.b16 %v310
        %v1157 = vunpack.c.l.b16 %v311
        %v1158 = vunpack.c.l.b16 %v312
        %v1159 = vunpack.c.l.b16 %v313
        %v1160 = vunpack.c.l.b16 %v314
        %v1161 = vunpack.c.l.b16 %v315
        %v1162 = vunpack.c.l.b16 %v316
        %v1163 = vpack.c.b16 %v828, %v1149
        %v1164 = vpack.c.b16 %v830, %v1150
        %v1165 = vpack.c.b16 %v832, %v1151
        %v1166 = vpack.c.b16 %v834, %v1152
        %v1167 = vpack.c.b16 %v836, %v1153
        %v1168 = vpack.c.b16 %v838, %v1154
        %v1169 = vpack.c.b16 %v840, %v1155
        %v1170 = vpack.c.b16 %v842, %v1156
        %v1171 = vpack.c.b16 %v844, %v1157
        %v1172 = vpack.c.b16 %v846, %v1158
        %v1173 = vpack.c.b16 %v848, %v1159
        %v1174 = vpack.c.b16 %v850, %v1160
        %v1175 = vpack.c.b16 %v852, %v1161
        %v1176 = vpack.c.b16 %v854, %v1162
        %v1177 = vrot.slane %v1163, 1
        %v1178 = vrot.slane %v925, 1
        %v1179 = vsel %vm728, %v1177, %v1178
        %v1180 = vrot.slane %v1164, 1
        %v1181 = vrot.slane %v926, 1
        %v1182 = vsel %vm728, %v1180, %v1181
        %v1183 = vrot.slane %v1165, 1
        %v1184 = vrot.slane %v927, 1
        %v1185 = vsel %vm728, %v1183, %v1184
        %v1186 = vrot.slane %v1166, 1
        %v1187 = vrot.slane %v928, 1
        %v1188 = vsel %vm728, %v1186, %v1187
        %v1189 = vrot.slane %v1167, 1
        %v1190 = vrot.slane %v929, 1
        %v1191 = vsel %vm728, %v1189, %v1190
        %v1192 = vrot.slane %v1168, 1
        %v1193 = vrot.slane %v930, 1
        %v1194 = vsel %vm728, %v1192, %v1193
        %v1195 = vrot.slane %v1169, 1
        %v1196 = vrot.slane %v931, 1
        %v1197 = vsel %vm728, %v1195, %v1196
        %v1198 = vrot.slane %v1170, 1
        %v1199 = vrot.slane %v932, 1
        %v1200 = vsel %vm728, %v1198, %v1199
        %v1201 = vrot.slane %v1171, 1
        %v1202 = vrot.slane %v933, 1
        %v1203 = vsel %vm728, %v1201, %v1202
        %v1204 = vrot.slane %v1172, 1
        %v1205 = vrot.slane %v934, 1
        %v1206 = vsel %vm728, %v1204, %v1205
        %v1207 = vrot.slane %v1173, 1
        %v1208 = vrot.slane %v935, 1
        %v1209 = vsel %vm728, %v1207, %v1208
        %v1210 = vrot.slane %v1174, 1
        %v1211 = vrot.slane %v936, 1
        %v1212 = vsel %vm728, %v1210, %v1211
        %v1213 = vrot.slane %v1175, 1
        %v1214 = vrot.slane %v937, 1
        %v1215 = vsel %vm728, %v1213, %v1214
        %v1216 = vrot.slane %v1176, 1
        %v1217 = vrot.slane %v938, 1
        %v1218 = vsel %vm728, %v1216, %v1217
        %1219 = vrot.lane.b32.xlu0 %v1179, 40
        %v1220 = vpop.permute.xlu0 %1219
        %1221 = vrot.lane.b32.xlu0 %v1182, 40
        %v1222 = vpop.permute.xlu0 %1221
        %1223 = vrot.lane.b32.xlu0 %v1185, 40
        %v1224 = vpop.permute.xlu0 %1223
        %1225 = vrot.lane.b32.xlu0 %v1188, 40
        %v1226 = vpop.permute.xlu0 %1225
        %1227 = vrot.lane.b32.xlu0 %v1191, 40
        %v1228 = vpop.permute.xlu0 %1227
        %1229 = vrot.lane.b32.xlu0 %v1194, 40
        %v1230 = vpop.permute.xlu0 %1229
        %1231 = vrot.lane.b32.xlu0 %v1197, 40
        %v1232 = vpop.permute.xlu0 %1231
        %1233 = vrot.lane.b32.xlu0 %v1200, 40
        %v1234 = vpop.permute.xlu0 %1233
        %1235 = vrot.lane.b32.xlu0 %v1203, 40
        %v1236 = vpop.permute.xlu0 %1235
        %1237 = vrot.lane.b32.xlu0 %v1206, 40
        %v1238 = vpop.permute.xlu0 %1237
        %1239 = vrot.lane.b32.xlu0 %v1209, 40
        %v1240 = vpop.permute.xlu0 %1239
        %1241 = vrot.lane.b32.xlu0 %v1212, 40
        %v1242 = vpop.permute.xlu0 %1241
        %1243 = vrot.lane.b32.xlu0 %v1215, 40
        %v1244 = vpop.permute.xlu0 %1243
        %1245 = vrot.lane.b32.xlu0 %v1218, 40
        %v1246 = vpop.permute.xlu0 %1245
        %v1275 = vunpack.c.l.b16 %v321
        %v1276 = vunpack.c.l.b16 %v322
        %v1277 = vunpack.c.l.b16 %v323
        %v1278 = vunpack.c.l.b16 %v324
        %v1279 = vunpack.c.l.b16 %v325
        %v1280 = vunpack.c.l.b16 %v326
        %v1281 = vunpack.c.l.b16 %v327
        %v1282 = vunpack.c.l.b16 %v328
        %v1283 = vunpack.c.l.b16 %v329
        %v1284 = vunpack.c.l.b16 %v330
        %v1285 = vunpack.c.l.b16 %v331
        %v1286 = vunpack.c.l.b16 %v332
        %v1287 = vunpack.c.l.b16 %v333
        %v1288 = vunpack.c.l.b16 %v334
        %v1289 = vunpack.c.l.b16 %v335
        %v1290 = vunpack.c.l.b16 %v336
        %v1291 = vunpack.c.l.b16 %v337
        %v1292 = vunpack.c.l.b16 %v338
        %v1293 = vunpack.c.l.b16 %v339
        %v1294 = vunpack.c.l.b16 %v340
        %v1295 = vunpack.c.l.b16 %v341
        %v1296 = vunpack.c.l.b16 %v342
        %v1297 = vunpack.c.l.b16 %v343
        %v1298 = vunpack.c.l.b16 %v344
        %v1299 = vunpack.c.l.b16 %v345
        %v1300 = vunpack.c.l.b16 %v346
        %v1301 = vunpack.c.l.b16 %v347
        %v1302 = vunpack.c.l.b16 %v348
        %v1303 = vpack.c.b16 %v1276, %v1275
        %v1304 = vpack.c.b16 %v1278, %v1277
        %v1305 = vpack.c.b16 %v1280, %v1279
        %v1306 = vpack.c.b16 %v1282, %v1281
        %v1307 = vpack.c.b16 %v1284, %v1283
        %v1308 = vpack.c.b16 %v1286, %v1285
        %v1309 = vpack.c.b16 %v1288, %v1287
        %v1310 = vpack.c.b16 %v1290, %v1289
        %v1311 = vpack.c.b16 %v1292, %v1291
        %v1312 = vpack.c.b16 %v1294, %v1293
        %v1313 = vpack.c.b16 %v1296, %v1295
        %v1314 = vpack.c.b16 %v1298, %v1297
        %v1315 = vpack.c.b16 %v1300, %v1299
        %v1316 = vpack.c.b16 %v1302, %v1301
        %1317 = vrot.lane.b32.xlu0 %v1303, 48
        %v1318 = vpop.permute.xlu0 %1317
        %1319 = vrot.lane.b32.xlu0 %v1304, 48
        %v1320 = vpop.permute.xlu0 %1319
        %1321 = vrot.lane.b32.xlu0 %v1305, 48
        %v1322 = vpop.permute.xlu0 %1321
        %1323 = vrot.lane.b32.xlu0 %v1306, 48
        %v1324 = vpop.permute.xlu0 %1323
        %1325 = vrot.lane.b32.xlu0 %v1307, 48
        %v1326 = vpop.permute.xlu0 %1325
        %1327 = vrot.lane.b32.xlu0 %v1308, 48
        %v1328 = vpop.permute.xlu0 %1327
        %1329 = vrot.lane.b32.xlu0 %v1309, 48
        %v1330 = vpop.permute.xlu0 %1329
        %1331 = vrot.lane.b32.xlu0 %v1310, 48
        %v1332 = vpop.permute.xlu0 %1331
        %1333 = vrot.lane.b32.xlu0 %v1311, 48
        %v1334 = vpop.permute.xlu0 %1333
        %1335 = vrot.lane.b32.xlu0 %v1312, 48
        %v1336 = vpop.permute.xlu0 %1335
        %1337 = vrot.lane.b32.xlu0 %v1313, 48
        %v1338 = vpop.permute.xlu0 %1337
        %1339 = vrot.lane.b32.xlu0 %v1314, 48
        %v1340 = vpop.permute.xlu0 %1339
        %1341 = vrot.lane.b32.xlu0 %v1315, 48
        %v1342 = vpop.permute.xlu0 %1341
        %1343 = vrot.lane.b32.xlu0 %v1316, 48
        %v1344 = vpop.permute.xlu0 %1343
        %v1359 = vunpack.c.l.b16 %v349
        %v1360 = vunpack.c.l.b16 %v350
        %v1361 = vunpack.c.l.b16 %v351
        %v1362 = vunpack.c.l.b16 %v352
        %v1363 = vunpack.c.l.b16 %v353
        %v1364 = vunpack.c.l.b16 %v354
        %v1365 = vunpack.c.l.b16 %v355
        %v1366 = vunpack.c.l.b16 %v356
        %v1367 = vunpack.c.l.b16 %v357
        %v1368 = vunpack.c.l.b16 %v358
        %v1369 = vunpack.c.l.b16 %v359
        %v1370 = vunpack.c.l.b16 %v360
        %v1371 = vunpack.c.l.b16 %v361
        %v1372 = vunpack.c.l.b16 %v362
        %v1373 = vpack.c.b16 %v1359, %v1359
        %v1374 = vpack.c.b16 %v1360, %v1360
        %v1375 = vpack.c.b16 %v1361, %v1361
        %v1376 = vpack.c.b16 %v1362, %v1362
        %v1377 = vpack.c.b16 %v1363, %v1363
        %v1378 = vpack.c.b16 %v1364, %v1364
        %v1379 = vpack.c.b16 %v1365, %v1365
        %v1380 = vpack.c.b16 %v1366, %v1366
        %v1381 = vpack.c.b16 %v1367, %v1367
        %v1382 = vpack.c.b16 %v1368, %v1368
        %v1383 = vpack.c.b16 %v1369, %v1369
        %v1384 = vpack.c.b16 %v1370, %v1370
        %v1385 = vpack.c.b16 %v1371, %v1371
        %v1386 = vpack.c.b16 %v1372, %v1372
        %v1388 = vshrl.u32 %v1303, 16
        %v1390 = vshll.u32 %v1303, 16
        %v1392 = vrot.slane %v1390, 1
        %v1393 = vor.u32 %v1388, %v1392
        %v1395 = vshll.u32 %v1373, 16
        %v1397 = vrot.slane %v1395, 1
        %v1398 = vsel %vm489, %v1393, %v1397
        %v1400 = vshrl.u32 %v1304, 16
        %v1402 = vshll.u32 %v1304, 16
        %v1404 = vrot.slane %v1402, 1
        %v1405 = vor.u32 %v1400, %v1404
        %v1407 = vshll.u32 %v1374, 16
        %v1409 = vrot.slane %v1407, 1
        %v1410 = vsel %vm489, %v1405, %v1409
        %v1412 = vshrl.u32 %v1305, 16
        %v1414 = vshll.u32 %v1305, 16
        %v1416 = vrot.slane %v1414, 1
        %v1417 = vor.u32 %v1412, %v1416
        %v1419 = vshll.u32 %v1375, 16
        %v1421 = vrot.slane %v1419, 1
        %v1422 = vsel %vm489, %v1417, %v1421
        %v1424 = vshrl.u32 %v1306, 16
        %v1426 = vshll.u32 %v1306, 16
        %v1428 = vrot.slane %v1426, 1
        %v1429 = vor.u32 %v1424, %v1428
        %v1431 = vshll.u32 %v1376, 16
        %v1433 = vrot.slane %v1431, 1
        %v1434 = vsel %vm489, %v1429, %v1433
        %v1436 = vshrl.u32 %v1307, 16
        %v1438 = vshll.u32 %v1307, 16
        %v1440 = vrot.slane %v1438, 1
        %v1441 = vor.u32 %v1436, %v1440
        %v1443 = vshll.u32 %v1377, 16
        %v1445 = vrot.slane %v1443, 1
        %v1446 = vsel %vm489, %v1441, %v1445
        %v1448 = vshrl.u32 %v1308, 16
        %v1450 = vshll.u32 %v1308, 16
        %v1452 = vrot.slane %v1450, 1
        %v1453 = vor.u32 %v1448, %v1452
        %v1455 = vshll.u32 %v1378, 16
        %v1457 = vrot.slane %v1455, 1
        %v1458 = vsel %vm489, %v1453, %v1457
        %v1460 = vshrl.u32 %v1309, 16
        %v1462 = vshll.u32 %v1309, 16
        %v1464 = vrot.slane %v1462, 1
        %v1465 = vor.u32 %v1460, %v1464
        %v1467 = vshll.u32 %v1379, 16
        %v1469 = vrot.slane %v1467, 1
        %v1470 = vsel %vm489, %v1465, %v1469
        %v1472 = vshrl.u32 %v1310, 16
        %v1474 = vshll.u32 %v1310, 16
        %v1476 = vrot.slane %v1474, 1
        %v1477 = vor.u32 %v1472, %v1476
        %v1479 = vshll.u32 %v1380, 16
        %v1481 = vrot.slane %v1479, 1
        %v1482 = vsel %vm489, %v1477, %v1481
        %v1484 = vshrl.u32 %v1311, 16
        %v1486 = vshll.u32 %v1311, 16
        %v1488 = vrot.slane %v1486, 1
        %v1489 = vor.u32 %v1484, %v1488
        %v1491 = vshll.u32 %v1381, 16
        %v1493 = vrot.slane %v1491, 1
        %v1494 = vsel %vm489, %v1489, %v1493
        %v1496 = vshrl.u32 %v1312, 16
        %v1498 = vshll.u32 %v1312, 16
        %v1500 = vrot.slane %v1498, 1
        %v1501 = vor.u32 %v1496, %v1500
        %v1503 = vshll.u32 %v1382, 16
        %v1505 = vrot.slane %v1503, 1
        %v1506 = vsel %vm489, %v1501, %v1505
        %v1508 = vshrl.u32 %v1313, 16
        %v1510 = vshll.u32 %v1313, 16
        %v1512 = vrot.slane %v1510, 1
        %v1513 = vor.u32 %v1508, %v1512
        %v1515 = vshll.u32 %v1383, 16
        %v1517 = vrot.slane %v1515, 1
        %v1518 = vsel %vm489, %v1513, %v1517
        %v1520 = vshrl.u32 %v1314, 16
        %v1522 = vshll.u32 %v1314, 16
        %v1524 = vrot.slane %v1522, 1
        %v1525 = vor.u32 %v1520, %v1524
        %v1527 = vshll.u32 %v1384, 16
        %v1529 = vrot.slane %v1527, 1
        %v1530 = vsel %vm489, %v1525, %v1529
        %v1532 = vshrl.u32 %v1315, 16
        %v1534 = vshll.u32 %v1315, 16
        %v1536 = vrot.slane %v1534, 1
        %v1537 = vor.u32 %v1532, %v1536
        %v1539 = vshll.u32 %v1385, 16
        %v1541 = vrot.slane %v1539, 1
        %v1542 = vsel %vm489, %v1537, %v1541
        %v1544 = vshrl.u32 %v1316, 16
        %v1546 = vshll.u32 %v1316, 16
        %v1548 = vrot.slane %v1546, 1
        %v1549 = vor.u32 %v1544, %v1548
        %v1551 = vshll.u32 %v1386, 16
        %v1553 = vrot.slane %v1551, 1
        %v1554 = vsel %vm489, %v1549, %v1553
        %1555 = vrot.lane.b32.xlu0 %v1398, 56
        %v1556 = vpop.permute.xlu0 %1555
        %1557 = vrot.lane.b32.xlu0 %v1410, 56
        %v1558 = vpop.permute.xlu0 %1557
        %1559 = vrot.lane.b32.xlu0 %v1422, 56
        %v1560 = vpop.permute.xlu0 %1559
        %1561 = vrot.lane.b32.xlu0 %v1434, 56
        %v1562 = vpop.permute.xlu0 %1561
        %1563 = vrot.lane.b32.xlu0 %v1446, 56
        %v1564 = vpop.permute.xlu0 %1563
        %1565 = vrot.lane.b32.xlu0 %v1458, 56
        %v1566 = vpop.permute.xlu0 %1565
        %1567 = vrot.lane.b32.xlu0 %v1470, 56
        %v1568 = vpop.permute.xlu0 %1567
        %1569 = vrot.lane.b32.xlu0 %v1482, 56
        %v1570 = vpop.permute.xlu0 %1569
        %1571 = vrot.lane.b32.xlu0 %v1494, 56
        %v1572 = vpop.permute.xlu0 %1571
        %1573 = vrot.lane.b32.xlu0 %v1506, 56
        %v1574 = vpop.permute.xlu0 %1573
        %1575 = vrot.lane.b32.xlu0 %v1518, 56
        %v1576 = vpop.permute.xlu0 %1575
        %1577 = vrot.lane.b32.xlu0 %v1530, 56
        %v1578 = vpop.permute.xlu0 %1577
        %1579 = vrot.lane.b32.xlu0 %v1542, 56
        %v1580 = vpop.permute.xlu0 %1579
        %1581 = vrot.lane.b32.xlu0 %v1554, 56
        %v1582 = vpop.permute.xlu0 %1581
        %v1597 = vunpack.c.l.b16 %v363
        %v1598 = vunpack.c.l.b16 %v364
        %v1599 = vunpack.c.l.b16 %v365
        %v1600 = vunpack.c.l.b16 %v366
        %v1601 = vunpack.c.l.b16 %v367
        %v1602 = vunpack.c.l.b16 %v368
        %v1603 = vunpack.c.l.b16 %v369
        %v1604 = vunpack.c.l.b16 %v370
        %v1605 = vunpack.c.l.b16 %v371
        %v1606 = vunpack.c.l.b16 %v372
        %v1607 = vunpack.c.l.b16 %v373
        %v1608 = vunpack.c.l.b16 %v374
        %v1609 = vunpack.c.l.b16 %v375
        %v1610 = vunpack.c.l.b16 %v376
        %v1611 = vpack.c.b16 %v1276, %v1597
        %v1612 = vpack.c.b16 %v1278, %v1598
        %v1613 = vpack.c.b16 %v1280, %v1599
        %v1614 = vpack.c.b16 %v1282, %v1600
        %v1615 = vpack.c.b16 %v1284, %v1601
        %v1616 = vpack.c.b16 %v1286, %v1602
        %v1617 = vpack.c.b16 %v1288, %v1603
        %v1618 = vpack.c.b16 %v1290, %v1604
        %v1619 = vpack.c.b16 %v1292, %v1605
        %v1620 = vpack.c.b16 %v1294, %v1606
        %v1621 = vpack.c.b16 %v1296, %v1607
        %v1622 = vpack.c.b16 %v1298, %v1608
        %v1623 = vpack.c.b16 %v1300, %v1609
        %v1624 = vpack.c.b16 %v1302, %v1610
        %v1625 = vrot.slane %v1611, 1
        %v1626 = vrot.slane %v1373, 1
        %v1627 = vsel %vm728, %v1625, %v1626
        %v1628 = vrot.slane %v1612, 1
        %v1629 = vrot.slane %v1374, 1
        %v1630 = vsel %vm728, %v1628, %v1629
        %v1631 = vrot.slane %v1613, 1
        %v1632 = vrot.slane %v1375, 1
        %v1633 = vsel %vm728, %v1631, %v1632
        %v1634 = vrot.slane %v1614, 1
        %v1635 = vrot.slane %v1376, 1
        %v1636 = vsel %vm728, %v1634, %v1635
        %v1637 = vrot.slane %v1615, 1
        %v1638 = vrot.slane %v1377, 1
        %v1639 = vsel %vm728, %v1637, %v1638
        %v1640 = vrot.slane %v1616, 1
        %v1641 = vrot.slane %v1378, 1
        %v1642 = vsel %vm728, %v1640, %v1641
        %v1643 = vrot.slane %v1617, 1
        %v1644 = vrot.slane %v1379, 1
        %v1645 = vsel %vm728, %v1643, %v1644
        %v1646 = vrot.slane %v1618, 1
        %v1647 = vrot.slane %v1380, 1
        %v1648 = vsel %vm728, %v1646, %v1647
        %v1649 = vrot.slane %v1619, 1
        %v1650 = vrot.slane %v1381, 1
        %v1651 = vsel %vm728, %v1649, %v1650
        %v1652 = vrot.slane %v1620, 1
        %v1653 = vrot.slane %v1382, 1
        %v1654 = vsel %vm728, %v1652, %v1653
        %v1655 = vrot.slane %v1621, 1
        %v1656 = vrot.slane %v1383, 1
        %v1657 = vsel %vm728, %v1655, %v1656
        %v1658 = vrot.slane %v1622, 1
        %v1659 = vrot.slane %v1384, 1
        %v1660 = vsel %vm728, %v1658, %v1659
        %v1661 = vrot.slane %v1623, 1
        %v1662 = vrot.slane %v1385, 1
        %v1663 = vsel %vm728, %v1661, %v1662
        %v1664 = vrot.slane %v1624, 1
        %v1665 = vrot.slane %v1386, 1
        %v1666 = vsel %vm728, %v1664, %v1665
        %1667 = vrot.lane.b32.xlu0 %v1627, 64
        %v1668 = vpop.permute.xlu0 %1667
        %1669 = vrot.lane.b32.xlu0 %v1630, 64
        %v1670 = vpop.permute.xlu0 %1669
        %1671 = vrot.lane.b32.xlu0 %v1633, 64
        %v1672 = vpop.permute.xlu0 %1671
        %1673 = vrot.lane.b32.xlu0 %v1636, 64
        %v1674 = vpop.permute.xlu0 %1673
        %1675 = vrot.lane.b32.xlu0 %v1639, 64
        %v1676 = vpop.permute.xlu0 %1675
        %1677 = vrot.lane.b32.xlu0 %v1642, 64
        %v1678 = vpop.permute.xlu0 %1677
        %1679 = vrot.lane.b32.xlu0 %v1645, 64
        %v1680 = vpop.permute.xlu0 %1679
        %1681 = vrot.lane.b32.xlu0 %v1648, 64
        %v1682 = vpop.permute.xlu0 %1681
        %1683 = vrot.lane.b32.xlu0 %v1651, 64
        %v1684 = vpop.permute.xlu0 %1683
        %1685 = vrot.lane.b32.xlu0 %v1654, 64
        %v1686 = vpop.permute.xlu0 %1685
        %1687 = vrot.lane.b32.xlu0 %v1657, 64
        %v1688 = vpop.permute.xlu0 %1687
        %1689 = vrot.lane.b32.xlu0 %v1660, 64
        %v1690 = vpop.permute.xlu0 %1689
        %1691 = vrot.lane.b32.xlu0 %v1663, 64
        %v1692 = vpop.permute.xlu0 %1691
        %1693 = vrot.lane.b32.xlu0 %v1666, 64
        %v1694 = vpop.permute.xlu0 %1693
        %vm1695 = vcmask 64512
        %v1697 = vsel %vm1695, %v433, %v659
        %v1699 = vsel %vm1695, %v434, %v661
        %v1701 = vsel %vm1695, %v435, %v663
        %v1703 = vsel %vm1695, %v436, %v665
        %v1705 = vsel %vm1695, %v437, %v667
        %v1707 = vsel %vm1695, %v438, %v669
        %v1709 = vsel %vm1695, %v439, %v671
        %v1711 = vsel %vm1695, %v440, %v673
        %v1713 = vsel %vm1695, %v441, %v675
        %v1715 = vsel %vm1695, %v442, %v677
        %v1717 = vsel %vm1695, %v443, %v679
        %v1719 = vsel %vm1695, %v444, %v681
        %v1721 = vsel %vm1695, %v445, %v683
        %v1723 = vsel %vm1695, %v446, %v685
        %vm1724 = vcmask 130048
        %v1726 = vsel %vm1724, %v1697, %v772
        %v1728 = vsel %vm1724, %v1699, %v774
        %v1730 = vsel %vm1724, %v1701, %v776
        %v1732 = vsel %vm1724, %v1703, %v778
        %v1734 = vsel %vm1724, %v1705, %v780
        %v1736 = vsel %vm1724, %v1707, %v782
        %v1738 = vsel %vm1724, %v1709, %v784
        %v1740 = vsel %vm1724, %v1711, %v786
        %v1742 = vsel %vm1724, %v1713, %v788
        %v1744 = vsel %vm1724, %v1715, %v790
        %v1746 = vsel %vm1724, %v1717, %v792
        %v1748 = vsel %vm1724, %v1719, %v794
        %v1750 = vsel %vm1724, %v1721, %v796
        %v1752 = vsel %vm1724, %v1723, %v798
        %vm1753 = vcmask 195584
        %v1755 = vsel %vm1753, %v1726, %v870
        %v1757 = vsel %vm1753, %v1728, %v872
        %v1759 = vsel %vm1753, %v1730, %v874
        %v1761 = vsel %vm1753, %v1732, %v876
        %v1763 = vsel %vm1753, %v1734, %v878
        %v1765 = vsel %vm1753, %v1736, %v880
        %v1767 = vsel %vm1753, %v1738, %v882
        %v1769 = vsel %vm1753, %v1740, %v884
        %v1771 = vsel %vm1753, %v1742, %v886
        %v1773 = vsel %vm1753, %v1744, %v888
        %v1775 = vsel %vm1753, %v1746, %v890
        %v1777 = vsel %vm1753, %v1748, %v892
        %v1779 = vsel %vm1753, %v1750, %v894
        %v1781 = vsel %vm1753, %v1752, %v896
        %vm1782 = vcmask 261120
        %v1784 = vsel %vm1782, %v1755, %v1108
        %v1786 = vsel %vm1782, %v1757, %v1110
        %v1788 = vsel %vm1782, %v1759, %v1112
        %v1790 = vsel %vm1782, %v1761, %v1114
        %v1792 = vsel %vm1782, %v1763, %v1116
        %v1794 = vsel %vm1782, %v1765, %v1118
        %v1796 = vsel %vm1782, %v1767, %v1120
        %v1798 = vsel %vm1782, %v1769, %v1122
        %v1800 = vsel %vm1782, %v1771, %v1124
        %v1802 = vsel %vm1782, %v1773, %v1126
        %v1804 = vsel %vm1782, %v1775, %v1128
        %v1806 = vsel %vm1782, %v1777, %v1130
        %v1808 = vsel %vm1782, %v1779, %v1132
        %v1810 = vsel %vm1782, %v1781, %v1134
        %vm1811 = vcmask 326656
        %v1813 = vsel %vm1811, %v1784, %v1220
        %v1815 = vsel %vm1811, %v1786, %v1222
        %v1817 = vsel %vm1811, %v1788, %v1224
        %v1819 = vsel %vm1811, %v1790, %v1226
        %v1821 = vsel %vm1811, %v1792, %v1228
        %v1823 = vsel %vm1811, %v1794, %v1230
        %v1825 = vsel %vm1811, %v1796, %v1232
        %v1827 = vsel %vm1811, %v1798, %v1234
        %v1829 = vsel %vm1811, %v1800, %v1236
        %v1831 = vsel %vm1811, %v1802, %v1238
        %v1833 = vsel %vm1811, %v1804, %v1240
        %v1835 = vsel %vm1811, %v1806, %v1242
        %v1837 = vsel %vm1811, %v1808, %v1244
        %v1839 = vsel %vm1811, %v1810, %v1246
        %vm1840 = vcmask 392192
        %v1842 = vsel %vm1840, %v1813, %v1318
        %v1844 = vsel %vm1840, %v1815, %v1320
        %v1846 = vsel %vm1840, %v1817, %v1322
        %v1848 = vsel %vm1840, %v1819, %v1324
        %v1850 = vsel %vm1840, %v1821, %v1326
        %v1852 = vsel %vm1840, %v1823, %v1328
        %v1854 = vsel %vm1840, %v1825, %v1330
        %v1856 = vsel %vm1840, %v1827, %v1332
        %v1858 = vsel %vm1840, %v1829, %v1334
        %v1860 = vsel %vm1840, %v1831, %v1336
        %v1862 = vsel %vm1840, %v1833, %v1338
        %v1864 = vsel %vm1840, %v1835, %v1340
        %v1866 = vsel %vm1840, %v1837, %v1342
        %v1868 = vsel %vm1840, %v1839, %v1344
        %vm1869 = vcmask 457728
        %v1871 = vsel %vm1869, %v1842, %v1556
        %v1873 = vsel %vm1869, %v1844, %v1558
        %v1875 = vsel %vm1869, %v1846, %v1560
        %v1877 = vsel %vm1869, %v1848, %v1562
        %v1879 = vsel %vm1869, %v1850, %v1564
        %v1881 = vsel %vm1869, %v1852, %v1566
        %v1883 = vsel %vm1869, %v1854, %v1568
        %v1885 = vsel %vm1869, %v1856, %v1570
        %v1887 = vsel %vm1869, %v1858, %v1572
        %v1889 = vsel %vm1869, %v1860, %v1574
        %v1891 = vsel %vm1869, %v1862, %v1576
        %v1893 = vsel %vm1869, %v1864, %v1578
        %v1895 = vsel %vm1869, %v1866, %v1580
        %v1897 = vsel %vm1869, %v1868, %v1582
        %vm1898 = vcmask 523264
        %v1900 = vsel %vm1898, %v1871, %v1668
        %v1902 = vsel %vm1898, %v1873, %v1670
        %v1904 = vsel %vm1898, %v1875, %v1672
        %v1906 = vsel %vm1898, %v1877, %v1674
        %v1908 = vsel %vm1898, %v1879, %v1676
        %v1910 = vsel %vm1898, %v1881, %v1678
        %v1912 = vsel %vm1898, %v1883, %v1680
        %v1914 = vsel %vm1898, %v1885, %v1682
        %v1916 = vsel %vm1898, %v1887, %v1684
        %v1918 = vsel %vm1898, %v1889, %v1686
        %v1920 = vsel %vm1898, %v1891, %v1688
        %v1922 = vsel %vm1898, %v1893, %v1690
        %v1924 = vsel %vm1898, %v1895, %v1692
        %v1926 = vsel %vm1898, %v1897, %v1694
        %v1927 = vld [vmem:[%s1] sm:$0xf]
        %v1928 = vld [vmem:[%s1 + $0x4] sm:$0xf]
        %v1929 = vld [vmem:[%s1 + $0x8] sm:$0xf]
        %v1930 = vld [vmem:[%s1 + $0xc] sm:$0xf]
        %v1931 = vld [vmem:[%s1 + $0x10] sm:$0xf]
        %v1932 = vld [vmem:[%s1 + $0x14] sm:$0xf]
        %v1933 = vld [vmem:[%s1 + $0x18] sm:$0xf]
        %v1934 = vld [vmem:[%s1 + $0x1c] sm:$0xf]
        %v1935 = vld [vmem:[%s1 + $0x20] sm:$0xf]
        %v1945 = vunpack.c.l.b16 %v1927
        %v1946 = vunpack.c.l.b16 %v1928
        %v1947 = vunpack.c.l.b16 %v1929
        %v1948 = vunpack.c.l.b16 %v1930
        %v1949 = vunpack.c.l.b16 %v1931
        %v1950 = vunpack.c.l.b16 %v1932
        %v1951 = vunpack.c.l.b16 %v1933
        %v1952 = vunpack.c.l.b16 %v1934
        %v1953 = vunpack.c.l.b16 %v1935
        %v1954 = vpack.c.b16 %v1946, %v1945
        %v1955 = vpack.c.b16 %v1948, %v1947
        %v1956 = vpack.c.b16 %v1950, %v1949
        %v1957 = vpack.c.b16 %v1952, %v1951
        %v1958 = vpack.c.b16 %v1953, %v1953
        %vm1963 = vcmask 588800
        %v1964 = vsel %vm1963, %v1900, 0
        %v1966 = vsel %vm1963, %v1902, 0
        %v1968 = vsel %vm1963, %v1904, 0
        %v1970 = vsel %vm1963, %v1906, 0
        %v1972 = vsel %vm1963, %v1908, 0
        %v1974 = vsel %vm1963, %v1910, 0
        %v1976 = vsel %vm1963, %v1912, 0
        %v1978 = vsel %vm1963, %v1914, 0
        %v1980 = vsel %vm1963, %v1916, 0
        %v1982 = vsel %vm1963, %v1918, 0
        %v1984 = vsel %vm1963, %v1920, 0
        %v1986 = vsel %vm1963, %v1922, 0
        %v1988 = vsel %vm1963, %v1924, 0
        %v1990 = vsel %vm1963, %v1926, 0
        %vm1992 = vcmask 1043456
        %v1994 = vsel %vm1992, %v1958, 0
        %1996 = vmatpush.bf16.msra.mxu0 0
        %1997 = vmatpush.bf16.msra.mxu0 0
        %1998 = vmatpush.bf16.msra.mxu0 0
        %1999 = vmatpush.bf16.msra.mxu0 %v1994
        %2000 = vmatpush.bf16.msra.mxu0 %v1957
        %2001 = vmatpush.bf16.msra.mxu0 %v1956
        %2002 = vmatpush.bf16.msra.mxu0 %v1955
        %2003 = vmatpush.bf16.msra.mxu0 %v1954
        %2004 = vmatmul.bf16.gmra.mxu0 %v1964
        %v2005 = vpop.f32.mrf.mxu0
        %v2006 = vadd.f32 0.0, %v2005
        %v2007 = vpop.f32.mrf.mxu0
        %v2008 = vadd.f32 0.0, %v2007
        %2009 = vmatmul.bf16.gmra.mxu0 %v1966
        %v2010 = vpop.f32.mrf.mxu0
        %v2011 = vadd.f32 0.0, %v2010
        %v2012 = vpop.f32.mrf.mxu0
        %v2013 = vadd.f32 0.0, %v2012
        %2014 = vmatmul.bf16.gmra.mxu0 %v1968
        %v2015 = vpop.f32.mrf.mxu0
        %v2016 = vadd.f32 0.0, %v2015
        %v2017 = vpop.f32.mrf.mxu0
        %v2018 = vadd.f32 0.0, %v2017
        %2019 = vmatmul.bf16.gmra.mxu0 %v1970
        %v2020 = vpop.f32.mrf.mxu0
        %v2021 = vadd.f32 0.0, %v2020
        %v2022 = vpop.f32.mrf.mxu0
        %v2023 = vadd.f32 0.0, %v2022
        %2024 = vmatmul.bf16.gmra.mxu0 %v1972
        %v2025 = vpop.f32.mrf.mxu0
        %v2026 = vadd.f32 0.0, %v2025
        %v2027 = vpop.f32.mrf.mxu0
        %v2028 = vadd.f32 0.0, %v2027
        %2029 = vmatmul.bf16.gmra.mxu0 %v1974
        %v2030 = vpop.f32.mrf.mxu0
        %v2031 = vadd.f32 0.0, %v2030
        %v2032 = vpop.f32.mrf.mxu0
        %v2033 = vadd.f32 0.0, %v2032
        %2034 = vmatmul.bf16.gmra.mxu0 %v1976
        %v2035 = vpop.f32.mrf.mxu0
        %v2036 = vadd.f32 0.0, %v2035
        %v2037 = vpop.f32.mrf.mxu0
        %v2038 = vadd.f32 0.0, %v2037
        %2039 = vmatmul.bf16.gmra.mxu0 %v1978
        %v2040 = vpop.f32.mrf.mxu0
        %v2041 = vadd.f32 0.0, %v2040
        %v2042 = vpop.f32.mrf.mxu0
        %v2043 = vadd.f32 0.0, %v2042
        %2044 = vmatmul.bf16.gmra.mxu0 %v1980
        %v2045 = vpop.f32.mrf.mxu0
        %v2046 = vadd.f32 0.0, %v2045
        %v2047 = vpop.f32.mrf.mxu0
        %v2048 = vadd.f32 0.0, %v2047
        %2049 = vmatmul.bf16.gmra.mxu0 %v1982
        %v2050 = vpop.f32.mrf.mxu0
        %v2051 = vadd.f32 0.0, %v2050
        %v2052 = vpop.f32.mrf.mxu0
        %v2053 = vadd.f32 0.0, %v2052
        %2054 = vmatmul.bf16.gmra.mxu0 %v1984
        %v2055 = vpop.f32.mrf.mxu0
        %v2056 = vadd.f32 0.0, %v2055
        %v2057 = vpop.f32.mrf.mxu0
        %v2058 = vadd.f32 0.0, %v2057
        %2059 = vmatmul.bf16.gmra.mxu0 %v1986
        %v2060 = vpop.f32.mrf.mxu0
        %v2061 = vadd.f32 0.0, %v2060
        %v2062 = vpop.f32.mrf.mxu0
        %v2063 = vadd.f32 0.0, %v2062
        %2064 = vmatmul.bf16.gmra.mxu0 %v1988
        %v2065 = vpop.f32.mrf.mxu0
        %v2066 = vadd.f32 0.0, %v2065
        %v2067 = vpop.f32.mrf.mxu0
        %v2068 = vadd.f32 0.0, %v2067
        %2069 = vmatmul.bf16.gmra.mxu0 %v1990
        %v2070 = vpop.f32.mrf.mxu0
        %v2071 = vadd.f32 0.0, %v2070
        %v2072 = vpop.f32.mrf.mxu0
        %v2073 = vadd.f32 0.0, %v2072
        %2074 = vdwg.mxu0
        %v2075 = vlaneseq
        %v2076 = vshrl.u32 %v2075, 7
        %v2077 = vadd.s32 %v2076, 8
        %vm2078 = vcmp.lt.s32.totalorder %v2076, 14
        %vm2079 = vcmp.lt.s32.totalorder %v2077, 14
        %v2080 = vsel %vm2078, %v2006, 0.0
        %v2081 = vsel %vm2079, %v2008, 0.0
        %v2082 = vsel %vm2078, %v2011, 0.0
        %v2083 = vsel %vm2079, %v2013, 0.0
        %v2084 = vsel %vm2078, %v2016, 0.0
        %v2085 = vsel %vm2079, %v2018, 0.0
        %v2086 = vsel %vm2078, %v2021, 0.0
        %v2087 = vsel %vm2079, %v2023, 0.0
        %v2088 = vsel %vm2078, %v2026, 0.0
        %v2089 = vsel %vm2079, %v2028, 0.0
        %v2090 = vsel %vm2078, %v2031, 0.0
        %v2091 = vsel %vm2079, %v2033, 0.0
        %v2092 = vsel %vm2078, %v2036, 0.0
        %v2093 = vsel %vm2079, %v2038, 0.0
        %v2094 = vsel %vm2078, %v2041, 0.0
        %v2095 = vsel %vm2079, %v2043, 0.0
        %v2096 = vsel %vm2078, %v2046, 0.0
        %v2097 = vsel %vm2079, %v2048, 0.0
        %v2098 = vsel %vm2078, %v2051, 0.0
        %v2099 = vsel %vm2079, %v2053, 0.0
        %v2100 = vsel %vm2078, %v2056, 0.0
        %v2101 = vsel %vm2079, %v2058, 0.0
        %v2102 = vsel %vm2078, %v2061, 0.0
        %v2103 = vsel %vm2079, %v2063, 0.0
        %v2104 = vsel %vm2078, %v2066, 0.0
        %v2105 = vsel %vm2079, %v2068, 0.0
        %v2106 = vsel %vm2078, %v2071, 0.0
        %v2107 = vsel %vm2079, %v2073, 0.0
        %v2108 = vadd.f32 %v2080, %v2081
        %v2109 = vadd.f32 %v2108, %v2082
        %v2110 = vadd.f32 %v2109, %v2083
        %v2111 = vadd.f32 %v2110, %v2084
        %v2112 = vadd.f32 %v2111, %v2085
        %v2113 = vadd.f32 %v2112, %v2086
        %v2114 = vadd.f32 %v2113, %v2087
        %v2115 = vadd.f32 %v2114, %v2088
        %v2116 = vadd.f32 %v2115, %v2089
        %v2117 = vadd.f32 %v2116, %v2090
        %v2118 = vadd.f32 %v2117, %v2091
        %v2119 = vadd.f32 %v2118, %v2092
        %v2120 = vadd.f32 %v2119, %v2093
        %v2121 = vadd.f32 %v2120, %v2094
        %v2122 = vadd.f32 %v2121, %v2095
        %v2123 = vadd.f32 %v2122, %v2096
        %v2124 = vadd.f32 %v2123, %v2097
        %v2125 = vadd.f32 %v2124, %v2098
        %v2126 = vadd.f32 %v2125, %v2099
        %v2127 = vadd.f32 %v2126, %v2100
        %v2128 = vadd.f32 %v2127, %v2101
        %v2129 = vadd.f32 %v2128, %v2102
        %v2130 = vadd.f32 %v2129, %v2103
        %v2131 = vadd.f32 %v2130, %v2104
        %v2132 = vadd.f32 %v2131, %v2105
        %v2133 = vadd.f32 %v2132, %v2106
        %v2134 = vadd.f32 %v2133, %v2107
        %v2135 = vrot.slane %v2134, 4
        %v2136 = vadd.f32 %v2134, %v2135
        %v2137 = vrot.slane %v2136, 2
        %v2138 = vadd.f32 %v2136, %v2137
        %v2139 = vrot.slane %v2138, 1
        %v2140 = vadd.f32 %v2138, %v2139
        %2141 = vst [vmem:[%s182] sm:$0x1] %v2140
        %v2142 = vmul.f32 %v2080, %v2080
        %v2143 = vmul.f32 %v2081, %v2081
        %v2144 = vmul.f32 %v2082, %v2082
        %v2145 = vmul.f32 %v2083, %v2083
        %v2146 = vmul.f32 %v2084, %v2084
        %v2147 = vmul.f32 %v2085, %v2085
        %v2148 = vmul.f32 %v2086, %v2086
        %v2149 = vmul.f32 %v2087, %v2087
        %v2150 = vmul.f32 %v2088, %v2088
        %v2151 = vmul.f32 %v2089, %v2089
        %v2152 = vmul.f32 %v2090, %v2090
        %v2153 = vmul.f32 %v2091, %v2091
        %v2154 = vmul.f32 %v2092, %v2092
        %v2155 = vmul.f32 %v2093, %v2093
        %v2156 = vmul.f32 %v2094, %v2094
        %v2157 = vmul.f32 %v2095, %v2095
        %v2158 = vmul.f32 %v2096, %v2096
        %v2159 = vmul.f32 %v2097, %v2097
        %v2160 = vmul.f32 %v2098, %v2098
        %v2161 = vmul.f32 %v2099, %v2099
        %v2162 = vmul.f32 %v2100, %v2100
        %v2163 = vmul.f32 %v2101, %v2101
        %v2164 = vmul.f32 %v2102, %v2102
        %v2165 = vmul.f32 %v2103, %v2103
        %v2166 = vmul.f32 %v2104, %v2104
        %v2167 = vmul.f32 %v2105, %v2105
        %v2168 = vmul.f32 %v2106, %v2106
        %v2169 = vmul.f32 %v2107, %v2107
        %v2170 = vadd.f32 %v2142, %v2143
        %v2171 = vadd.f32 %v2170, %v2144
        %v2172 = vadd.f32 %v2171, %v2145
        %v2173 = vadd.f32 %v2172, %v2146
        %v2174 = vadd.f32 %v2173, %v2147
        %v2175 = vadd.f32 %v2174, %v2148
        %v2176 = vadd.f32 %v2175, %v2149
        %v2177 = vadd.f32 %v2176, %v2150
        %v2178 = vadd.f32 %v2177, %v2151
        %v2179 = vadd.f32 %v2178, %v2152
        %v2180 = vadd.f32 %v2179, %v2153
        %v2181 = vadd.f32 %v2180, %v2154
        %v2182 = vadd.f32 %v2181, %v2155
        %v2183 = vadd.f32 %v2182, %v2156
        %v2184 = vadd.f32 %v2183, %v2157
        %v2185 = vadd.f32 %v2184, %v2158
        %v2186 = vadd.f32 %v2185, %v2159
        %v2187 = vadd.f32 %v2186, %v2160
        %v2188 = vadd.f32 %v2187, %v2161
        %v2189 = vadd.f32 %v2188, %v2162
        %v2190 = vadd.f32 %v2189, %v2163
        %v2191 = vadd.f32 %v2190, %v2164
        %v2192 = vadd.f32 %v2191, %v2165
        %v2193 = vadd.f32 %v2192, %v2166
        %v2194 = vadd.f32 %v2193, %v2167
        %v2195 = vadd.f32 %v2194, %v2168
        %v2196 = vadd.f32 %v2195, %v2169
        %v2197 = vrot.slane %v2196, 4
        %v2198 = vadd.f32 %v2196, %v2197
        %v2199 = vrot.slane %v2198, 2
        %v2200 = vadd.f32 %v2198, %v2199
        %v2201 = vrot.slane %v2200, 1
        %v2202 = vadd.f32 %v2200, %v2201
        %2203 = vst [vmem:[%s188] sm:$0x1] %v2202
        %s2204 = sand.u32 %s90, 1
        %s2205 = scalar_lea.sflag [#allocation3], %s2204
        %s2206 = sand.u32 %s90, 1
        %s2207 = scalar_lea.vmem [#allocation2], %s2206
        %s2208 = sand.u32 %s118, 1
        %s2209 = scalar_lea.sflag [#allocation5], %s2208
        %s2210 = sand.u32 %s118, 1
        %s2211 = scalar_lea.vmem [#allocation4], %s2210
        // Predicated region
        $region29: #{tpu_custom_call.1} parent=27 // pred_check
          %p2212 = pneg %p100
        $region30: #{tpu_custom_call.1} parent=27 // pred_check_branch
          %2214 = sbr.rel (%p2212) target = $region32
        $region31: #{tpu_custom_call.1} parent=27 // pred_region
          %s2215 = sadd.s32 %s25, %s26
          %2217 = vsyncadd %s2205, 0
          %s2218 = scalar_lea.hbm %s2, %s2215
          %s2220 = sshll.u32 %s2207, 4
          %s2221 = int_to_ptr.vmem [resolvable:$true] %s2220
          %s2222 = sshll.u32 %s2218, 4
          %s2223 = int_to_ptr.hbm [resolvable:$true] %s2222
          %2225 = dma.vmem_to_hbm [thread:$0]  %s2221, 16, %s2223, %s2205
        $region32: #{tpu_custom_call.1} parent=27 // pred_fallthru
          _
        // Predicated region
        $region33: #{tpu_custom_call.1} parent=27 // pred_check
          %p2226 = pneg %p128
        $region34: #{tpu_custom_call.1} parent=27 // pred_check_branch
          %2228 = sbr.rel (%p2226) target = $region36
        $region35: #{tpu_custom_call.1} parent=27 // pred_region
          %s2229 = sadd.s32 %s25, %s26
          %2231 = vsyncadd %s2209, 0
          %s2232 = scalar_lea.hbm %s3, %s2229
          %s2234 = sshll.u32 %s2211, 4
          %s2235 = int_to_ptr.vmem [resolvable:$true] %s2234
          %s2236 = sshll.u32 %s2232, 4
          %s2237 = int_to_ptr.hbm [resolvable:$true] %s2236
          %2239 = dma.vmem_to_hbm [thread:$0]  %s2235, 16, %s2237, %s2209
        $region36: #{tpu_custom_call.1} parent=27 // pred_fallthru
          _
      $region28: #{tpu_custom_call.1} parent=5 // pred_fallthru
        _
      %p2240 = scmp.le.s32.totalorder 2, %s16
      // Predicated region
      $region37: #{tpu_custom_call.1} parent=5 // pred_check
        %p2241 = pneg %p2240
      $region38: #{tpu_custom_call.1} parent=5 // pred_check_branch
        %2243 = sbr.rel (%p2241) target = $region40
      $region39: #{tpu_custom_call.1} parent=5 // pred_region
        %s2244 = ssub.s32 %s16, 2
        // Predicated region
        $region41: #{tpu_custom_call.1} parent=39 // pred_check
          %p2245 = pneg %p106
        $region42: #{tpu_custom_call.1} parent=39 // pred_check_branch
          %2247 = sbr.rel (%p2245) target = $region44
        $region43: #{tpu_custom_call.1} parent=39 // pred_region
          %s2248 = sand.u32 %s91, 1
          %s2249 = scalar_lea.sflag [#allocation3], %s2248
          %s2250 = sand.u32 %s91, 1
          %s2251 = scalar_lea.vmem [#allocation2], %s2250
          %2253 = dma.done %s2249, 16
        $region44: #{tpu_custom_call.1} parent=39 // pred_fallthru
          _
        // Predicated region
        $region45: #{tpu_custom_call.1} parent=39 // pred_check
          %p2254 = pneg %p134
        $region46: #{tpu_custom_call.1} parent=39 // pred_check_branch
          %2256 = sbr.rel (%p2254) target = $region48
        $region47: #{tpu_custom_call.1} parent=39 // pred_region
          %s2257 = sand.u32 %s119, 1
          %s2258 = scalar_lea.sflag [#allocation5], %s2257
          %s2259 = sand.u32 %s119, 1
          %s2260 = scalar_lea.vmem [#allocation4], %s2259
          %2262 = dma.done %s2258, 16
        $region48: #{tpu_custom_call.1} parent=39 // pred_fallthru
          _
      $region40: #{tpu_custom_call.1} parent=5 // pred_fallthru
        _
    $region6: #{tpu_custom_call.1} parent=1 // loop_footer
      %s20 = sadd.s32 1, %s16
    $region7: #{tpu_custom_call.1} parent=1 // loop_footer_branch
      %15 = sbr.rel target = $region3
    $region8: #{tpu_custom_call.1} parent=1 // loop_exit
      _
    %2263 = vsyncpa [#allocation3], 1
    %s2264 = scalar_lea.sflag [#allocation3], 1
    %2265 = vsyncpa %s2264, 1
    %2266 = vsyncpa [#allocation5], 1
    %s2267 = scalar_lea.sflag [#allocation5], 1
    %2268 = vsyncpa %s2267, 1

</llo_original>
